<compile_context>
chip_gen: v6e
topology: v6e:2x2x1
jax: 0.10.0
libtpu: 0.0.40
codegen_flags: <defaults>
</compile_context>

<pallas_src>
import functools
import math

import jax
import jax.numpy as jnp
from jax.experimental import pallas as pl
from jax.experimental.pallas import tpu as pltpu


def _pad_to(v, m):
    return ((v + m - 1) // m) * m


# ----------------------------------------------------------------------------
# Fused network kernel: one batch *tile* per grid step, everything in VMEM.
# ----------------------------------------------------------------------------
def _tse_cnn_kernel(x_ref, w1_ref, b1_ref, w2_ref, b2_ref, w3_ref, b3_ref,
                    fw1_ref, fb1_ref, fw2_ref, fb2_ref, o_ref,
                    *, batch_tile, seq_len, valid_len):
    M = x_ref.shape[0]                                  # batch_tile * seq_len

    def shift_up(y, t):
        # result[l] = y[l + t].  The t wrapped tail rows per sample are garbage
        # but only ever contaminate rows beyond the valid conv range, which are
        # masked before the global max.  Positive shift M - t == -t (mod M).
        return y if t == 0 else pltpu.roll(y, M - t, axis=0)

    # ---- conv1 + ReLU: 3 tiny-K tap matmuls on the raw bf16 input; the tap
    # ---- shifts are applied to the f32 outputs with sublane rolls (XLU). ----
    xb = x_ref[...]                                         # (M, cin_p) bf16
    acc = jnp.dot(xb, w1_ref[0], preferred_element_type=jnp.float32)
    acc += shift_up(jnp.dot(xb, w1_ref[1],
                            preferred_element_type=jnp.float32), 1)
    acc += shift_up(jnp.dot(xb, w1_ref[2],
                            preferred_element_type=jnp.float32), 2)
    h = jnp.maximum(acc + b1_ref[...], 0.0)                 # (M, 128) f32
    # F.max_pool1d(kernel_size=1, stride=1) is the identity -> nothing to do.

    # ---- conv2 / conv3 + ReLU: taps fused along K (K = 3*128 = 384), one
    # ---- MXU matmul per layer; shifted copies via rolls, cast bf16 once. ----
    def conv_k3_fused(h32, ws_ref, b_ref):
        stacked = jnp.concatenate(
            [h32.astype(jnp.bfloat16),
             shift_up(h32, 1).astype(jnp.bfloat16),
             shift_up(h32, 2).astype(jnp.bfloat16)], axis=1)   # (M, 384) bf16
        y = jnp.dot(stacked, ws_ref[...],
                    preferred_element_type=jnp.float32)
        return jnp.maximum(y + b_ref[...], 0.0)

    h = conv_k3_fused(h, w2_ref, b2_ref)                    # (M, 128) f32
    h = conv_k3_fused(h, w3_ref, b3_ref)                    # (M, 256) f32

    # ---- AdaptiveMaxPool1d(1): mask invalid / padded positions, then a
    # ---- per-sample max over the (valid) length axis. ----------------------
    c3 = h.shape[1]
    h = h.reshape(batch_tile, seq_len, c3)
    pos = jax.lax.broadcasted_iota(jnp.int32, h.shape, 1)
    pooled = jnp.max(jnp.where(pos < valid_len, h, -1e30), axis=1)  # (B, 256)

    # ---- fc1 + ReLU, fc2 (M = batch_tile now, padded channels stay 0). -----
    f1 = jnp.dot(pooled.astype(jnp.bfloat16), fw1_ref[...],
                 preferred_element_type=jnp.float32) + fb1_ref[...]
    f1 = jnp.maximum(f1, 0.0)                               # (B, 128)
    o_ref[...] = (jnp.dot(f1.astype(jnp.bfloat16), fw2_ref[...],
                          preferred_element_type=jnp.float32) + fb2_ref[...])


def tse_cnn_forward(params, x_ncl, num_classes):
    """x_ncl: (N, input_dim, L), channels-first as fed to the PyTorch Conv1d."""
    N, cin, L = x_ncl.shape
    assert L >= 7, "need L >= 7 for three valid k=3 convolutions"

    cin_p = params['w1'].shape[1]
    ncp = params['fw2'].shape[1]

    # Batch tile: ~0.3 MiB of live activations per sample at L=64, so a
    # 32-sample tile fits the 32 MiB default scoped-VMEM on v5e/v6e/v7x with
    # ample headroom (raise vmem_limit_bytes if you enlarge it).
    b_tile = N if N <= 32 else 32
    n_pad = _pad_to(N, b_tile)
    l_pad = _pad_to(max(L, 8), 16)          # sublane / bf16-packing aligned

    # Host glue: channels-last, pad to (n_pad, l_pad, cin_p), flatten
    # batch*length into one sublane-dense axis, cast bf16.  This is the only
    # operand streamed per grid step (weights are tiny and stay resident).
    x = jnp.transpose(x_ncl.astype(jnp.float32), (0, 2, 1))
    x = jnp.pad(x, ((0, n_pad - N), (0, l_pad - L), (0, cin_p - cin)))
    x = x.reshape(n_pad * l_pad, cin_p).astype(jnp.bfloat16)

    kernel = functools.partial(_tse_cnn_kernel, batch_tile=b_tile,
                               seq_len=l_pad, valid_len=L - 6)

    def full(shape):
        return pl.BlockSpec(shape, lambda n, _nd=len(shape): (0,) * _nd)

    out = pl.pallas_call(
        kernel,
        out_shape=jax.ShapeDtypeStruct((n_pad, ncp), jnp.float32),
        grid=(n_pad // b_tile,),
        in_specs=[
            pl.BlockSpec((b_tile * l_pad, cin_p), lambda n: (n, 0)),
            full(params['w1'].shape), full(params['b1'].shape),
            full(params['w2s'].shape), full(params['b2'].shape),
            full(params['w3s'].shape), full(params['b3'].shape),
            full(params['fw1'].shape), full(params['fb1'].shape),
            full(params['fw2'].shape), full(params['fb2'].shape),
        ],
        out_specs=pl.BlockSpec((b_tile, ncp), lambda n: (n, 0)),
        compiler_params=pltpu.CompilerParams(
            # On v7x, (pltpu.CORE_PARALLEL,) shards batch tiles across both TCs.
            dimension_semantics=("parallel",)),
    )(x, params['w1'], params['b1'], params['w2s'], params['b2'],
      params['w3s'], params['b3'], params['fw1'], params['fb1'],
      params['fw2'], params['fb2'])

    return out[:N, :num_classes]


# ----------------------------------------------------------------------------
# Deterministic parameters, pre-transposed / padded / tap-stacked / bf16-cast
# once at build time.  Also returns the raw PyTorch-layout weights for the
# independent reference check.
# ----------------------------------------------------------------------------
def build_params(key, input_dim, num_classes):
    ks = jax.random.split(key, 10)

    def uniform(k, shape, fan_in):
        bound = 1.0 / math.sqrt(fan_in)
        return jax.random.uniform(k, shape, jnp.float32, -bound, bound)

    raw = dict(
        w1=uniform(ks[0], (32, input_dim, 3), input_dim * 3),
        b1=uniform(ks[1], (32,), input_dim * 3),
        w2=uniform(ks[2], (128, 32, 3), 32 * 3),
        b2=uniform(ks[3], (128,), 32 * 3),
        w3=uniform(ks[4], (256, 128, 3), 128 * 3),
        b3=uniform(ks[5], (256,), 128 * 3),
        fw1=uniform(ks[6], (64, 256), 256),
        fb1=uniform(ks[7], (64,), 256),
        fw2=uniform(ks[8], (num_classes, 64), 64),
        fb2=uniform(ks[9], (num_classes,), 64),
    )

    def pad_bias(b, width):
        return jnp.zeros((1, width), jnp.float32).at[0, :b.shape[0]].set(b)

    cin_p = _pad_to(input_dim, 16)

    # conv1: per-tap (3, cin_p, 128) -- K is tiny, taps stay separate.
    w1p = jnp.zeros((3, cin_p, 128), jnp.float32)
    w1p = w1p.at[:, :input_dim, :32].set(jnp.transpose(raw['w1'], (2, 1, 0)))

    # conv2 / conv3: taps fused along K -> (3*128, cout_p).
    def stack_taps(w, cin_pad, cout_pad):
        cout, cin, k = w.shape
        wt = jnp.transpose(w, (2, 1, 0))                      # (k, cin, cout)
        ws = jnp.zeros((k * cin_pad, cout_pad), jnp.float32)
        for t in range(k):
            ws = ws.at[t * cin_pad:t * cin_pad + cin, :cout].set(wt[t])
        return ws

    def pack_fc(w, in_pad, out_pad):
        out_f, in_f = w.shape
        return jnp.zeros((in_pad, out_pad), jnp.float32).at[:in_f, :out_f].set(w.T)

    packed = dict(
        w1=w1p.astype(jnp.bfloat16),
        b1=pad_bias(raw['b1'], 128),
        w2s=stack_taps(raw['w2'], 128, 128).astype(jnp.bfloat16),
        b2=pad_bias(raw['b2'], 128),
        w3s=stack_taps(raw['w3'], 128, 256).astype(jnp.bfloat16),
        b3=pad_bias(raw['b3'], 256),
        fw1=pack_fc(raw['fw1'], 256, 128).astype(jnp.bfloat16),
        fb1=pad_bias(raw['fb1'], 128),
        fw2=pack_fc(raw['fw2'], 128, 128).astype(jnp.bfloat16),
        fb2=pad_bias(raw['fb2'], 128),
    )
    return packed, raw


# ----------------------------------------------------------------------------
# Pure-JAX reference from the RAW (PyTorch-layout) weights, using the same
# bf16-inputs / f32-accumulate numerics.  Independent of the kernel's packing,
# rolling and masking, so it validates them.
# ----------------------------------------------------------------------------
def reference_forward(raw, x_ncl, num_classes):
    x = jnp.transpose(x_ncl.astype(jnp.float32), (0, 2, 1))        # (N, L, cin)

    def conv_relu(h, w, b):                                        # w: (cout, cin, 3)
        lout = h.shape[1] - 2
        wt = jnp.transpose(w, (2, 1, 0)).astype(jnp.bfloat16)      # (3, cin, cout)
        acc = sum(jnp.einsum('nlc,co->nlo',
                             h[:, t:t + lout].astype(jnp.bfloat16), wt[t],
                             preferred_element_type=jnp.float32)
                  for t in range(3))
        return jnp.maximum(acc + b, 0.0)

    h = conv_relu(x, raw['w1'], raw['b1'])
    h = conv_relu(h, raw['w2'], raw['b2'])
    h = conv_relu(h, raw['w3'], raw['b3'])
    pooled = jnp.max(h, axis=1)                                    # (N, 256)
    f1 = jnp.maximum(
        jnp.dot(pooled.astype(jnp.bfloat16), raw['fw1'].T.astype(jnp.bfloat16),
                preferred_element_type=jnp.float32) + raw['fb1'], 0.0)
    return (jnp.dot(f1.astype(jnp.bfloat16), raw['fw2'].T.astype(jnp.bfloat16),
                    preferred_element_type=jnp.float32) + raw['fb2'])


if __name__ == "__main__":
    key = jax.random.PRNGKey(0)
    k_par, k_in = jax.random.split(key)

    N, INPUT_DIM, L, NUM_CLASSES = 2, 9, 64, 6
    params, raw = build_params(k_par, INPUT_DIM, NUM_CLASSES)
    x = jax.random.normal(k_in, (N, INPUT_DIM, L), jnp.float32)   # (batch, channels, length)

    fwd = jax.jit(functools.partial(tse_cnn_forward, num_classes=NUM_CLASSES))
    out = jax.block_until_ready(fwd(params, x))

    assert out.shape == (N, NUM_CLASSES), out.shape
    assert bool(jnp.all(jnp.isfinite(out)))

    ref = reference_forward(raw, x, NUM_CLASSES)
    assert bool(jnp.allclose(out, ref, rtol=2e-2, atol=2e-2)), (out, ref)

    print("KERNEL_OK")
</pallas_src>

<mosaic_0001>
module attributes {stable_mosaic.version = 11 : i64} {
  func.func @_tse_cnn_kernel(%arg0: i32, %arg1: memref<128x16xbf16, #tpu.memory_space<vmem>>, %arg2: memref<3x16x128xbf16, #tpu.memory_space<vmem>>, %arg3: memref<1x128xf32, #tpu.memory_space<vmem>>, %arg4: memref<384x128xbf16, #tpu.memory_space<vmem>>, %arg5: memref<1x128xf32, #tpu.memory_space<vmem>>, %arg6: memref<384x256xbf16, #tpu.memory_space<vmem>>, %arg7: memref<1x256xf32, #tpu.memory_space<vmem>>, %arg8: memref<256x128xbf16, #tpu.memory_space<vmem>>, %arg9: memref<1x128xf32, #tpu.memory_space<vmem>>, %arg10: memref<128x128xbf16, #tpu.memory_space<vmem>>, %arg11: memref<1x128xf32, #tpu.memory_space<vmem>>, %arg12: memref<2x128xf32, #tpu.memory_space<vmem>>) attributes {dimension_semantics = [#tpu.dimension_semantics<parallel>], iteration_bounds = array<i64: 1>, scalar_prefetch = 0 : i64, scratch_operands = 0 : i64, tpu.core_type = #tpu.core_type<tc>, window_params = [{transform_indices = @transform_0, window_bounds = array<i64: 128, 16>}, {pipeline_mode = #tpu.pipeline_mode<synchronous>, transform_indices = @transform_1, window_bounds = array<i64: 3, 16, 128>}, {pipeline_mode = #tpu.pipeline_mode<synchronous>, transform_indices = @transform_2, window_bounds = array<i64: 1, 128>}, {pipeline_mode = #tpu.pipeline_mode<synchronous>, transform_indices = @transform_3, window_bounds = array<i64: 384, 128>}, {pipeline_mode = #tpu.pipeline_mode<synchronous>, transform_indices = @transform_4, window_bounds = array<i64: 1, 128>}, {pipeline_mode = #tpu.pipeline_mode<synchronous>, transform_indices = @transform_5, window_bounds = array<i64: 384, 256>}, {pipeline_mode = #tpu.pipeline_mode<synchronous>, transform_indices = @transform_6, window_bounds = array<i64: 1, 256>}, {pipeline_mode = #tpu.pipeline_mode<synchronous>, transform_indices = @transform_7, window_bounds = array<i64: 256, 128>}, {pipeline_mode = #tpu.pipeline_mode<synchronous>, transform_indices = @transform_8, window_bounds = array<i64: 1, 128>}, {pipeline_mode = #tpu.pipeline_mode<synchronous>, transform_indices = @transform_9, window_bounds = array<i64: 128, 128>}, {pipeline_mode = #tpu.pipeline_mode<synchronous>, transform_indices = @transform_10, window_bounds = array<i64: 1, 128>}, {transform_indices = @transform_11, window_bounds = array<i64: 2, 128>}]} {
    %c0 = arith.constant 0 : index
    %c0_0 = arith.constant 0 : index
    %0 = vector.load %arg1[%c0, %c0_0] : memref<128x16xbf16, #tpu.memory_space<vmem>>, vector<128x16xbf16>
    %c0_1 = arith.constant 0 : index
    %c0_2 = arith.constant 0 : index
    %c0_3 = arith.constant 0 : index
    %1 = vector.load %arg2[%c0_1, %c0_2, %c0_3] : memref<3x16x128xbf16, #tpu.memory_space<vmem>>, vector<1x16x128xbf16>
    %2 = vector.shape_cast %1 : vector<1x16x128xbf16> to vector<16x128xbf16>
    %cst = arith.constant dense<0.000000e+00> : vector<128x128xf32>
    %3 = tpu.matmul %0, %2, %cst {dimension_numbers = #tpu.dot_dimension_numbers<[1], [0], [0], [1], [0, 0, 1, 1], [], []>} : vector<128x16xbf16>, vector<16x128xbf16>, vector<128x128xf32> -> vector<128x128xf32>
    %c1 = arith.constant 1 : index
    %c0_4 = arith.constant 0 : index
    %c0_5 = arith.constant 0 : index
    %4 = vector.load %arg2[%c1, %c0_4, %c0_5] : memref<3x16x128xbf16, #tpu.memory_space<vmem>>, vector<1x16x128xbf16>
    %5 = vector.shape_cast %4 : vector<1x16x128xbf16> to vector<16x128xbf16>
    %cst_6 = arith.constant dense<0.000000e+00> : vector<128x128xf32>
    %6 = tpu.matmul %0, %5, %cst_6 {dimension_numbers = #tpu.dot_dimension_numbers<[1], [0], [0], [1], [0, 0, 1, 1], [], []>} : vector<128x16xbf16>, vector<16x128xbf16>, vector<128x128xf32> -> vector<128x128xf32>
    %c127_i32 = arith.constant 127 : i32
    %7 = tpu.dynamic_rotate %6 by %c127_i32 dim 0 : vector<128x128xf32>, i32 -> vector<128x128xf32>
    %8 = arith.addf %3, %7 : vector<128x128xf32>
    %c2 = arith.constant 2 : index
    %c0_7 = arith.constant 0 : index
    %c0_8 = arith.constant 0 : index
    %9 = vector.load %arg2[%c2, %c0_7, %c0_8] : memref<3x16x128xbf16, #tpu.memory_space<vmem>>, vector<1x16x128xbf16>
    %10 = vector.shape_cast %9 : vector<1x16x128xbf16> to vector<16x128xbf16>
    %cst_9 = arith.constant dense<0.000000e+00> : vector<128x128xf32>
    %11 = tpu.matmul %0, %10, %cst_9 {dimension_numbers = #tpu.dot_dimension_numbers<[1], [0], [0], [1], [0, 0, 1, 1], [], []>} : vector<128x16xbf16>, vector<16x128xbf16>, vector<128x128xf32> -> vector<128x128xf32>
    %c126_i32 = arith.constant 126 : i32
    %12 = tpu.dynamic_rotate %11 by %c126_i32 dim 0 : vector<128x128xf32>, i32 -> vector<128x128xf32>
    %13 = arith.addf %8, %12 : vector<128x128xf32>
    %c0_10 = arith.constant 0 : index
    %c0_11 = arith.constant 0 : index
    %14 = vector.load %arg3[%c0_10, %c0_11] : memref<1x128xf32, #tpu.memory_space<vmem>>, vector<1x128xf32>
    %15 = vector.broadcast %14 : vector<1x128xf32> to vector<128x128xf32>
    %16 = arith.addf %13, %15 : vector<128x128xf32>
    %cst_12 = arith.constant 0.000000e+00 : f32
    %17 = vector.broadcast %cst_12 : f32 to vector<128x128xf32>
    %18 = arith.maximumf %16, %17 : vector<128x128xf32>
    %19 = arith.truncf %18 : vector<128x128xf32> to vector<128x128xbf16>
    %c127_i32_13 = arith.constant 127 : i32
    %20 = tpu.dynamic_rotate %18 by %c127_i32_13 dim 0 : vector<128x128xf32>, i32 -> vector<128x128xf32>
    %21 = arith.truncf %20 : vector<128x128xf32> to vector<128x128xbf16>
    %c126_i32_14 = arith.constant 126 : i32
    %22 = tpu.dynamic_rotate %18 by %c126_i32_14 dim 0 : vector<128x128xf32>, i32 -> vector<128x128xf32>
    %23 = arith.truncf %22 : vector<128x128xf32> to vector<128x128xbf16>
    %24 = tpu.concatenate %19, %21, %23 in 1 : vector<128x128xbf16>, vector<128x128xbf16>, vector<128x128xbf16> -> vector<128x384xbf16>
    %c0_15 = arith.constant 0 : index
    %c0_16 = arith.constant 0 : index
    %25 = vector.load %arg4[%c0_15, %c0_16] : memref<384x128xbf16, #tpu.memory_space<vmem>>, vector<384x128xbf16>
    %cst_17 = arith.constant dense<0.000000e+00> : vector<128x128xf32>
    %26 = tpu.matmul %24, %25, %cst_17 {dimension_numbers = #tpu.dot_dimension_numbers<[1], [0], [0], [1], [0, 0, 1, 1], [], []>} : vector<128x384xbf16>, vector<384x128xbf16>, vector<128x128xf32> -> vector<128x128xf32>
    %c0_18 = arith.constant 0 : index
    %c0_19 = arith.constant 0 : index
    %27 = vector.load %arg5[%c0_18, %c0_19] : memref<1x128xf32, #tpu.memory_space<vmem>>, vector<1x128xf32>
    %28 = vector.broadcast %27 : vector<1x128xf32> to vector<128x128xf32>
    %29 = arith.addf %26, %28 : vector<128x128xf32>
    %cst_20 = arith.constant 0.000000e+00 : f32
    %30 = vector.broadcast %cst_20 : f32 to vector<128x128xf32>
    %31 = arith.maximumf %29, %30 : vector<128x128xf32>
    %32 = arith.truncf %31 : vector<128x128xf32> to vector<128x128xbf16>
    %c127_i32_21 = arith.constant 127 : i32
    %33 = tpu.dynamic_rotate %31 by %c127_i32_21 dim 0 : vector<128x128xf32>, i32 -> vector<128x128xf32>
    %34 = arith.truncf %33 : vector<128x128xf32> to vector<128x128xbf16>
    %c126_i32_22 = arith.constant 126 : i32
    %35 = tpu.dynamic_rotate %31 by %c126_i32_22 dim 0 : vector<128x128xf32>, i32 -> vector<128x128xf32>
    %36 = arith.truncf %35 : vector<128x128xf32> to vector<128x128xbf16>
    %37 = tpu.concatenate %32, %34, %36 in 1 : vector<128x128xbf16>, vector<128x128xbf16>, vector<128x128xbf16> -> vector<128x384xbf16>
    %c0_23 = arith.constant 0 : index
    %c0_24 = arith.constant 0 : index
    %38 = vector.load %arg6[%c0_23, %c0_24] : memref<384x256xbf16, #tpu.memory_space<vmem>>, vector<384x256xbf16>
    %cst_25 = arith.constant dense<0.000000e+00> : vector<128x256xf32>
    %39 = tpu.matmul %37, %38, %cst_25 {dimension_numbers = #tpu.dot_dimension_numbers<[1], [0], [0], [1], [0, 0, 1, 1], [], []>} : vector<128x384xbf16>, vector<384x256xbf16>, vector<128x256xf32> -> vector<128x256xf32>
    %c0_26 = arith.constant 0 : index
    %c0_27 = arith.constant 0 : index
    %40 = vector.load %arg7[%c0_26, %c0_27] : memref<1x256xf32, #tpu.memory_space<vmem>>, vector<1x256xf32>
    %41 = vector.broadcast %40 : vector<1x256xf32> to vector<128x256xf32>
    %42 = arith.addf %39, %41 : vector<128x256xf32>
    %cst_28 = arith.constant 0.000000e+00 : f32
    %43 = vector.broadcast %cst_28 : f32 to vector<128x256xf32>
    %44 = arith.maximumf %42, %43 : vector<128x256xf32>
    %45 = vector.shape_cast %44 : vector<128x256xf32> to vector<2x64x256xf32>
    %46 = tpu.iota {dimensions = array<i32: 1>} : vector<2x64x256xi32>
    %c58_i32 = arith.constant 58 : i32
    %47 = vector.broadcast %c58_i32 : i32 to vector<2x64x256xi32>
    %48 = arith.cmpi slt, %46, %47 : vector<2x64x256xi32>
    %cst_29 = arith.constant -1.000000e+30 : f32
    %49 = vector.broadcast %cst_29 : f32 to vector<2x64x256xf32>
    %50 = arith.select %48, %45, %49 : vector<2x64x256xi1>, vector<2x64x256xf32>
    %cst_30 = arith.constant dense<0xFF800000> : vector<2x256xf32>
    %51 = vector.multi_reduction <maximumf>, %50, %cst_30 [1] : vector<2x64x256xf32> to vector<2x256xf32>
    %52 = arith.truncf %51 : vector<2x256xf32> to vector<2x256xbf16>
    %c0_31 = arith.constant 0 : index
    %c0_32 = arith.constant 0 : index
    %53 = vector.load %arg8[%c0_31, %c0_32] : memref<256x128xbf16, #tpu.memory_space<vmem>>, vector<256x128xbf16>
    %cst_33 = arith.constant dense<0.000000e+00> : vector<2x128xf32>
    %54 = tpu.matmul %52, %53, %cst_33 {dimension_numbers = #tpu.dot_dimension_numbers<[1], [0], [0], [1], [0, 0, 1, 1], [], []>} : vector<2x256xbf16>, vector<256x128xbf16>, vector<2x128xf32> -> vector<2x128xf32>
    %c0_34 = arith.constant 0 : index
    %c0_35 = arith.constant 0 : index
    %55 = vector.load %arg9[%c0_34, %c0_35] : memref<1x128xf32, #tpu.memory_space<vmem>>, vector<1x128xf32>
    %56 = vector.broadcast %55 : vector<1x128xf32> to vector<2x128xf32>
    %57 = arith.addf %54, %56 : vector<2x128xf32>
    %cst_36 = arith.constant 0.000000e+00 : f32
    %58 = vector.broadcast %cst_36 : f32 to vector<2x128xf32>
    %59 = arith.maximumf %57, %58 : vector<2x128xf32>
    %60 = arith.truncf %59 : vector<2x128xf32> to vector<2x128xbf16>
    %c0_37 = arith.constant 0 : index
    %c0_38 = arith.constant 0 : index
    %61 = vector.load %arg10[%c0_37, %c0_38] : memref<128x128xbf16, #tpu.memory_space<vmem>>, vector<128x128xbf16>
    %cst_39 = arith.constant dense<0.000000e+00> : vector<2x128xf32>
    %62 = tpu.matmul %60, %61, %cst_39 {dimension_numbers = #tpu.dot_dimension_numbers<[1], [0], [0], [1], [0, 0, 1, 1], [], []>} : vector<2x128xbf16>, vector<128x128xbf16>, vector<2x128xf32> -> vector<2x128xf32>
    %c0_40 = arith.constant 0 : index
    %c0_41 = arith.constant 0 : index
    %63 = vector.load %arg11[%c0_40, %c0_41] : memref<1x128xf32, #tpu.memory_space<vmem>>, vector<1x128xf32>
    %64 = vector.broadcast %63 : vector<1x128xf32> to vector<2x128xf32>
    %65 = arith.addf %62, %64 : vector<2x128xf32>
    %c0_42 = arith.constant 0 : index
    %c0_43 = arith.constant 0 : index
    %66 = vector.load %arg12[%c0_42, %c0_43] : memref<2x128xf32, #tpu.memory_space<vmem>>, vector<2x128xf32>
    tpu.vector_store %arg12[%c0_42, %c0_43], %65 {strides = array<i32>} : memref<2x128xf32, #tpu.memory_space<vmem>>, vector<2x128xf32>,
    return
  }
  func.func @transform_0(%arg0: i32) -> (i32, i32) {
    %c0_i32 = arith.constant 0 : i32
    %c0_i32_0 = arith.constant 0 : i32
    return %arg0, %c0_i32 : i32, i32
  }
  func.func @transform_1(%arg0: i32) -> (i32, i32, i32) {
    %c0_i32 = arith.constant 0 : i32
    %c0_i32_0 = arith.constant 0 : i32
    %c0_i32_1 = arith.constant 0 : i32
    %c0_i32_2 = arith.constant 0 : i32
    return %c0_i32, %c0_i32_0, %c0_i32_1 : i32, i32, i32
  }
  func.func @transform_2(%arg0: i32) -> (i32, i32) {
    %c0_i32 = arith.constant 0 : i32
    %c0_i32_0 = arith.constant 0 : i32
    %c0_i32_1 = arith.constant 0 : i32
    return %c0_i32, %c0_i32_0 : i32, i32
  }
  func.func @transform_3(%arg0: i32) -> (i32, i32) {
    %c0_i32 = arith.constant 0 : i32
    %c0_i32_0 = arith.constant 0 : i32
    %c0_i32_1 = arith.constant 0 : i32
    return %c0_i32, %c0_i32_0 : i32, i32
  }
  func.func @transform_4(%arg0: i32) -> (i32, i32) {
    %c0_i32 = arith.constant 0 : i32
    %c0_i32_0 = arith.constant 0 : i32
    %c0_i32_1 = arith.constant 0 : i32
    return %c0_i32, %c0_i32_0 : i32, i32
  }
  func.func @transform_5(%arg0: i32) -> (i32, i32) {
    %c0_i32 = arith.constant 0 : i32
    %c0_i32_0 = arith.constant 0 : i32
    %c0_i32_1 = arith.constant 0 : i32
    return %c0_i32, %c0_i32_0 : i32, i32
  }
  func.func @transform_6(%arg0: i32) -> (i32, i32) {
    %c0_i32 = arith.constant 0 : i32
    %c0_i32_0 = arith.constant 0 : i32
    %c0_i32_1 = arith.constant 0 : i32
    return %c0_i32, %c0_i32_0 : i32, i32
  }
  func.func @transform_7(%arg0: i32) -> (i32, i32) {
    %c0_i32 = arith.constant 0 : i32
    %c0_i32_0 = arith.constant 0 : i32
    %c0_i32_1 = arith.constant 0 : i32
    return %c0_i32, %c0_i32_0 : i32, i32
  }
  func.func @transform_8(%arg0: i32) -> (i32, i32) {
    %c0_i32 = arith.constant 0 : i32
    %c0_i32_0 = arith.constant 0 : i32
    %c0_i32_1 = arith.constant 0 : i32
    return %c0_i32, %c0_i32_0 : i32, i32
  }
  func.func @transform_9(%arg0: i32) -> (i32, i32) {
    %c0_i32 = arith.constant 0 : i32
    %c0_i32_0 = arith.constant 0 : i32
    %c0_i32_1 = arith.constant 0 : i32
    return %c0_i32, %c0_i32_0 : i32, i32
  }
  func.func @transform_10(%arg0: i32) -> (i32, i32) {
    %c0_i32 = arith.constant 0 : i32
    %c0_i32_0 = arith.constant 0 : i32
    %c0_i32_1 = arith.constant 0 : i32
    return %c0_i32, %c0_i32_0 : i32, i32
  }
  func.func @transform_11(%arg0: i32) -> (i32, i32) {
    %c0_i32 = arith.constant 0 : i32
    %c0_i32_0 = arith.constant 0 : i32
    return %arg0, %c0_i32 : i32, i32
  }
}

</mosaic_0001>

<llo_original>
// kernel: tse_cnn_forward.1
$region0: #{tse_cnn_forward.1}
  #allocation0 [shape = 'u32[]', space=smem, size = 0x4, offset = 0x4, fixed_abs, tag = 'smem constant byte address 0x4 - core index']
  #allocation1 [shape = 'u32[144,128]{1,0:T(1,128)}', space=vmem, size = 0x12000, scoped, tag = 'internal scratch']
  %s0 = inlined_call_operand.vmem [shape: bf16[128,16], index: 0, kind: input, shape index: {}]
  %s1 = inlined_call_operand.vmem [shape: bf16[3,16,128], index: 1, kind: input, shape index: {}]
  %s2 = inlined_call_operand.vmem [shape: f32[1,128], index: 2, kind: input, shape index: {}]
  %s3 = inlined_call_operand.vmem [shape: bf16[384,128], index: 3, kind: input, shape index: {}]
  %s4 = inlined_call_operand.vmem [shape: f32[1,128], index: 4, kind: input, shape index: {}]
  %s5 = inlined_call_operand.hbm [shape: bf16[384,256], index: 5, kind: input, shape index: {}]
  %s6 = inlined_call_operand.vmem [shape: f32[1,256], index: 6, kind: input, shape index: {}]
  %s7 = inlined_call_operand.hbm [shape: bf16[256,128], index: 7, kind: input, shape index: {}]
  %s8 = inlined_call_operand.vmem [shape: f32[1,128], index: 8, kind: input, shape index: {}]
  %s9 = inlined_call_operand.hbm [shape: bf16[128,128], index: 9, kind: input, shape index: {}]
  %s10 = inlined_call_operand.vmem [shape: f32[1,128], index: 10, kind: input, shape index: {}]
  %s11 = inlined_call_operand.hbm [shape: f32[2,128], index: 11, kind: output, shape index: {}]
  %s12 = sld [smem:[#allocation0]]
  $region66: #{tse_cnn_forward.1} parent=0
    _
  %s14 = ssub.s32 1, %s12
  %s15 = scalar_select 0, %s14, %s12
  $region1: #{tse_cnn_forward.1} parent=0
    #allocation2 [shape = 'u8[196608]{0}', space=vmem, size = 0x30000, scoped, tag = 'input window, operand 5, single buffered']
    #allocation3 [shape = 's32[1]{0}', space=sflag, size = 0x4, scoped, tag = 'scoped memory for tse_cnn_forward.1']
    #allocation4 [shape = 's32[1]{0}', space=sflag, size = 0x4, scoped, tag = 'scoped memory for tse_cnn_forward.1']
    #allocation5 [shape = 'u8[65536]{0}', space=vmem, size = 0x10000, scoped, tag = 'input window, operand 7, single buffered']
    #allocation6 [shape = 's32[1]{0}', space=sflag, size = 0x4, scoped, tag = 'scoped memory for tse_cnn_forward.1']
    #allocation7 [shape = 'u8[32768]{0}', space=vmem, size = 0x8000, scoped, tag = 'input window, operand 9, single buffered']
    #allocation8 [shape = 'u8[1024]{0}', space=vmem, size = 0x400, scoped, tag = 'output window, operand 0, single buffered']
    %16 = vsyncpa [#allocation3], 0
    %17 = vsyncpa [#allocation6], 0
    %18 = vsyncpa [#allocation4], 0
    // Predicated region
    $region2: #{tse_cnn_forward.1} parent=1 // pred_check
      _
    $region3: #{tse_cnn_forward.1} parent=1 // pred_check_branch
      %20 = sbr.rel (0) target = $region5
    $region4: #{tse_cnn_forward.1} parent=1 // pred_region
      _
    $region5: #{tse_cnn_forward.1} parent=1 // pred_fallthru
      _
    // Predicated region
    $region6: #{tse_cnn_forward.1} parent=1 // pred_check
      _
    $region7: #{tse_cnn_forward.1} parent=1 // pred_check_branch
      %22 = sbr.rel (0) target = $region9
    $region8: #{tse_cnn_forward.1} parent=1 // pred_region
      _
    $region9: #{tse_cnn_forward.1} parent=1 // pred_fallthru
      _
    // Predicated region
    $region10: #{tse_cnn_forward.1} parent=1 // pred_check
      _
    $region11: #{tse_cnn_forward.1} parent=1 // pred_check_branch
      %24 = sbr.rel (0) target = $region13
    $region12: #{tse_cnn_forward.1} parent=1 // pred_region
      _
    $region13: #{tse_cnn_forward.1} parent=1 // pred_fallthru
      _
    // Predicated region
    $region14: #{tse_cnn_forward.1} parent=1 // pred_check
      _
    $region15: #{tse_cnn_forward.1} parent=1 // pred_check_branch
      %26 = sbr.rel (0) target = $region17
    $region16: #{tse_cnn_forward.1} parent=1 // pred_region
      _
    $region17: #{tse_cnn_forward.1} parent=1 // pred_fallthru
      _
    // Predicated region
    $region18: #{tse_cnn_forward.1} parent=1 // pred_check
      _
    $region19: #{tse_cnn_forward.1} parent=1 // pred_check_branch
      %28 = sbr.rel (0) target = $region21
    $region20: #{tse_cnn_forward.1} parent=1 // pred_region
      _
    $region21: #{tse_cnn_forward.1} parent=1 // pred_fallthru
      _
    // Predicated region
    $region22: #{tse_cnn_forward.1} parent=1 // pred_check
      _
    $region23: #{tse_cnn_forward.1} parent=1 // pred_check_branch
      %30 = sbr.rel (0) target = $region25
    $region24: #{tse_cnn_forward.1} parent=1 // pred_region
      %s32 = ssub.s32 6144, 6144
      %33 = vsyncadd [#allocation3], %s32
      %s34 = sshll.u32 [#allocation2], 4
      %s35 = int_to_ptr.vmem [resolvable:$true] %s34
      %40 = dma.hbm_to_vmem [thread:$0]  %s5, 6144, %s35, [#allocation3], 128, 128, 8
    $region25: #{tse_cnn_forward.1} parent=1 // pred_fallthru
      _
    // Predicated region
    $region26: #{tse_cnn_forward.1} parent=1 // pred_check
      _
    $region27: #{tse_cnn_forward.1} parent=1 // pred_check_branch
      %42 = sbr.rel (0) target = $region29
    $region28: #{tse_cnn_forward.1} parent=1 // pred_region
      _
    $region29: #{tse_cnn_forward.1} parent=1 // pred_fallthru
      _
    // Predicated region
    $region30: #{tse_cnn_forward.1} parent=1 // pred_check
      _
    $region31: #{tse_cnn_forward.1} parent=1 // pred_check_branch
      %44 = sbr.rel (0) target = $region33
    $region32: #{tse_cnn_forward.1} parent=1 // pred_region
      %s46 = ssub.s32 2048, 2048
      %47 = vsyncadd [#allocation6], %s46
      %s48 = sshll.u32 [#allocation5], 4
      %s49 = int_to_ptr.vmem [resolvable:$true] %s48
      %54 = dma.hbm_to_vmem [thread:$0]  %s7, 2048, %s49, [#allocation6], 64, 64, 4
    $region33: #{tse_cnn_forward.1} parent=1 // pred_fallthru
      _
    // Predicated region
    $region34: #{tse_cnn_forward.1} parent=1 // pred_check
      _
    $region35: #{tse_cnn_forward.1} parent=1 // pred_check_branch
      %56 = sbr.rel (0) target = $region37
    $region36: #{tse_cnn_forward.1} parent=1 // pred_region
      _
    $region37: #{tse_cnn_forward.1} parent=1 // pred_fallthru
      _
    // Predicated region
    $region38: #{tse_cnn_forward.1} parent=1 // pred_check
      _
    $region39: #{tse_cnn_forward.1} parent=1 // pred_check_branch
      %58 = sbr.rel (0) target = $region41
    $region40: #{tse_cnn_forward.1} parent=1 // pred_region
      %s60 = ssub.s32 1024, 1024
      %61 = vsyncadd [#allocation6], %s60
      %s62 = sshll.u32 [#allocation7], 4
      %s63 = int_to_ptr.vmem [resolvable:$true] %s62
      %68 = dma.hbm_to_vmem [thread:$0]  %s9, 1024, %s63, [#allocation6], 64, 64, 4
    $region41: #{tse_cnn_forward.1} parent=1 // pred_fallthru
      _
    // Predicated region
    $region42: #{tse_cnn_forward.1} parent=1 // pred_check
      _
    $region43: #{tse_cnn_forward.1} parent=1 // pred_check_branch
      %70 = sbr.rel (0) target = $region45
    $region44: #{tse_cnn_forward.1} parent=1 // pred_region
      _
    $region45: #{tse_cnn_forward.1} parent=1 // pred_fallthru
      _
    // Predicated region
    $region46: #{tse_cnn_forward.1} parent=1 // pred_check
      _
    $region47: #{tse_cnn_forward.1} parent=1 // pred_check_branch
      %72 = sbr.rel (0) target = $region49
    $region48: #{tse_cnn_forward.1} parent=1 // pred_region
      %73 = dma.done [#allocation3], 6144
    $region49: #{tse_cnn_forward.1} parent=1 // pred_fallthru
      _
    // Predicated region
    $region50: #{tse_cnn_forward.1} parent=1 // pred_check
      _
    $region51: #{tse_cnn_forward.1} parent=1 // pred_check_branch
      %75 = sbr.rel (0) target = $region53
    $region52: #{tse_cnn_forward.1} parent=1 // pred_region
      %76 = dma.done [#allocation6], 2048
    $region53: #{tse_cnn_forward.1} parent=1 // pred_fallthru
      _
    // Predicated region
    $region54: #{tse_cnn_forward.1} parent=1 // pred_check
      _
    $region55: #{tse_cnn_forward.1} parent=1 // pred_check_branch
      %78 = sbr.rel (0) target = $region57
    $region56: #{tse_cnn_forward.1} parent=1 // pred_region
      %79 = dma.done [#allocation6], 1024
    $region57: #{tse_cnn_forward.1} parent=1 // pred_fallthru
      _
    %v81 = vld [vmem:[%s0] sm:$0xf]
    %v82 = vld [vmem:[%s0 + $0x4] sm:$0xf]
    %v83 = vld [vmem:[%s0 + $0x8] sm:$0xf]
    %v84 = vld [vmem:[%s0 + $0xc] sm:$0xf]
    %v85 = vld [vmem:[%s0 + $0x10] sm:$0xf]
    %v86 = vld [vmem:[%s0 + $0x14] sm:$0xf]
    %v87 = vld [vmem:[%s0 + $0x18] sm:$0xf]
    %v88 = vld [vmem:[%s0 + $0x1c] sm:$0xf]
    %v89 = vld [vmem:[%s0 + $0x20] sm:$0xf]
    %v90 = vld [vmem:[%s0 + $0x24] sm:$0xf]
    %v91 = vld [vmem:[%s0 + $0x28] sm:$0xf]
    %v92 = vld [vmem:[%s0 + $0x2c] sm:$0xf]
    %v93 = vld [vmem:[%s0 + $0x30] sm:$0xf]
    %v94 = vld [vmem:[%s0 + $0x34] sm:$0xf]
    %v95 = vld [vmem:[%s0 + $0x38] sm:$0xf]
    %v96 = vld [vmem:[%s0 + $0x3c] sm:$0xf]
    %v97 = vld [vmem:[%s1] sm:$0xf]
    %v98 = vld [vmem:[%s1 + $0x4] sm:$0xf]
    %s99 = scalar_lea.vmem %s1, 8
    %v100 = vld [vmem:[%s99] sm:$0xf]
    %v101 = vld [vmem:[%s99 + $0x4] sm:$0xf]
    %v118 = vunpack.c.l.b16 %v81
    %v119 = vunpack.c.l.b16 %v82
    %v120 = vunpack.c.l.b16 %v83
    %v121 = vunpack.c.l.b16 %v84
    %v122 = vunpack.c.l.b16 %v85
    %v123 = vunpack.c.l.b16 %v86
    %v124 = vunpack.c.l.b16 %v87
    %v125 = vunpack.c.l.b16 %v88
    %v126 = vunpack.c.l.b16 %v89
    %v127 = vunpack.c.l.b16 %v90
    %v128 = vunpack.c.l.b16 %v91
    %v129 = vunpack.c.l.b16 %v92
    %v130 = vunpack.c.l.b16 %v93
    %v131 = vunpack.c.l.b16 %v94
    %v132 = vunpack.c.l.b16 %v95
    %v133 = vunpack.c.l.b16 %v96
    %v134 = vpack.c.b16 %v119, %v118
    %v135 = vpack.c.b16 %v121, %v120
    %v136 = vpack.c.b16 %v123, %v122
    %v137 = vpack.c.b16 %v125, %v124
    %v138 = vpack.c.b16 %v127, %v126
    %v139 = vpack.c.b16 %v129, %v128
    %v140 = vpack.c.b16 %v131, %v130
    %v141 = vpack.c.b16 %v133, %v132
    %v144 = vunpack.c.l.b16 %v100
    %v145 = vunpack.c.l.b16 %v101
    %v146 = vpack.c.b16 %v145, %v144
    %vm148 = vcmask 130048
    %v150 = vsel %vm148, %v134, 0
    %v153 = vsel %vm148, %v135, 0
    %v156 = vsel %vm148, %v136, 0
    %v159 = vsel %vm148, %v137, 0
    %v162 = vsel %vm148, %v138, 0
    %v165 = vsel %vm148, %v139, 0
    %v168 = vsel %vm148, %v140, 0
    %v171 = vsel %vm148, %v141, 0
    %173 = vmatprep.subr.bf16.mxu0 0
    %174 = vmatpush1.bf16.msra.mxu0 0
    %175 = vmatprep.subr.bf16.mxu0 0
    %176 = vmatpush1.bf16.msra.mxu0 0
    %177 = vmatprep.subr.bf16.mxu0 0
    %178 = vmatpush1.bf16.msra.mxu0 0
    %179 = vmatprep.subr.bf16.mxu0 0
    %180 = vmatpush1.bf16.msra.mxu0 0
    %181 = vmatprep.subr.bf16.mxu0 0
    %182 = vmatpush1.bf16.msra.mxu0 0
    %183 = vmatprep.subr.bf16.mxu0 0
    %184 = vmatpush1.bf16.msra.mxu0 0
    %185 = vmatprep.subr.bf16.mxu0 0
    %186 = vmatpush1.bf16.msra.mxu0 0
    %187 = vmatprep.subr.bf16.mxu0 0
    %188 = vmatpush1.bf16.msra.mxu0 %v146
    %189 = vmatprep.subr.bf16.mxu0 0
    %190 = vmatpush2.bf16.msra.mxu0 0
    %191 = vmatprep.subr.bf16.mxu0 0
    %192 = vmatpush2.bf16.msra.mxu0 0
    %193 = vmatprep.subr.bf16.mxu0 0
    %194 = vmatpush2.bf16.msra.mxu0 0
    %195 = vmatprep.subr.bf16.mxu0 0
    %196 = vmatpush2.bf16.msra.mxu0 0
    %197 = vmatprep.subr.bf16.mxu0 0
    %198 = vmatpush2.bf16.msra.mxu0 0
    %199 = vmatprep.subr.bf16.mxu0 0
    %200 = vmatpush2.bf16.msra.mxu0 0
    %201 = vmatprep.subr.bf16.mxu0 0
    %202 = vmatpush2.bf16.msra.mxu0 0
    %203 = vmatprep.subr.bf16.mxu0 0
    %204 = vmatpush2.bf16.msra.mxu0 0
    %205 = vmatprep.mubr.bf16.mxu0 0
    %206 = vmatmul.mubr.bf16.gmra.mxu0 %v150
    %v207 = vpop.f32.mrf.mxu0
    %v208 = vadd.f32 0.0, %v207
    %v209 = vpop.f32.mrf.mxu0
    %v210 = vpop.f32.mrf.mxu0
    %v211 = vadd.f32 0.0, %v210
    %v212 = vpop.f32.mrf.mxu0
    %213 = vmatprep.mubr.bf16.mxu0 0
    %214 = vmatmul.mubr.bf16.gmra.mxu0 %v153
    %v215 = vpop.f32.mrf.mxu0
    %v216 = vadd.f32 0.0, %v215
    %v217 = vpop.f32.mrf.mxu0
    %v218 = vpop.f32.mrf.mxu0
    %v219 = vadd.f32 0.0, %v218
    %v220 = vpop.f32.mrf.mxu0
    %221 = vmatprep.mubr.bf16.mxu0 0
    %222 = vmatmul.mubr.bf16.gmra.mxu0 %v156
    %v223 = vpop.f32.mrf.mxu0
    %v224 = vadd.f32 0.0, %v223
    %v225 = vpop.f32.mrf.mxu0
    %v226 = vpop.f32.mrf.mxu0
    %v227 = vadd.f32 0.0, %v226
    %v228 = vpop.f32.mrf.mxu0
    %229 = vmatprep.mubr.bf16.mxu0 0
    %230 = vmatmul.mubr.bf16.gmra.mxu0 %v159
    %v231 = vpop.f32.mrf.mxu0
    %v232 = vadd.f32 0.0, %v231
    %v233 = vpop.f32.mrf.mxu0
    %v234 = vpop.f32.mrf.mxu0
    %v235 = vadd.f32 0.0, %v234
    %v236 = vpop.f32.mrf.mxu0
    %237 = vmatprep.mubr.bf16.mxu0 0
    %238 = vmatmul.mubr.bf16.gmra.mxu0 %v162
    %v239 = vpop.f32.mrf.mxu0
    %v240 = vadd.f32 0.0, %v239
    %v241 = vpop.f32.mrf.mxu0
    %v242 = vpop.f32.mrf.mxu0
    %v243 = vadd.f32 0.0, %v242
    %v244 = vpop.f32.mrf.mxu0
    %245 = vmatprep.mubr.bf16.mxu0 0
    %246 = vmatmul.mubr.bf16.gmra.mxu0 %v165
    %v247 = vpop.f32.mrf.mxu0
    %v248 = vadd.f32 0.0, %v247
    %v249 = vpop.f32.mrf.mxu0
    %v250 = vpop.f32.mrf.mxu0
    %v251 = vadd.f32 0.0, %v250
    %v252 = vpop.f32.mrf.mxu0
    %253 = vmatprep.mubr.bf16.mxu0 0
    %254 = vmatmul.mubr.bf16.gmra.mxu0 %v168
    %v255 = vpop.f32.mrf.mxu0
    %v256 = vadd.f32 0.0, %v255
    %v257 = vpop.f32.mrf.mxu0
    %v258 = vpop.f32.mrf.mxu0
    %v259 = vadd.f32 0.0, %v258
    %v260 = vpop.f32.mrf.mxu0
    %261 = vmatprep.mubr.bf16.mxu0 0
    %262 = vmatmul.mubr.bf16.gmra.mxu0 %v171
    %v263 = vpop.f32.mrf.mxu0
    %v264 = vadd.f32 0.0, %v263
    %v265 = vpop.f32.mrf.mxu0
    %v266 = vpop.f32.mrf.mxu0
    %v267 = vadd.f32 0.0, %v266
    %v268 = vpop.f32.mrf.mxu0
    %269 = vdwg.mxu0
    %v270 = vrot.slane %v208, 1
    %v271 = vrot.slane %v211, 1
    %v272 = vrot.slane %v216, 1
    %v273 = vrot.slane %v219, 1
    %v274 = vrot.slane %v224, 1
    %v275 = vrot.slane %v227, 1
    %v276 = vrot.slane %v232, 1
    %v277 = vrot.slane %v235, 1
    %v278 = vrot.slane %v240, 1
    %v279 = vrot.slane %v243, 1
    %v280 = vrot.slane %v248, 1
    %v281 = vrot.slane %v251, 1
    %v282 = vrot.slane %v256, 1
    %v283 = vrot.slane %v259, 1
    %v284 = vrot.slane %v264, 1
    %v285 = vrot.slane %v267, 1
    %v286 = vlaneseq
    %v287 = vshrl.u32 %v286, 7
    %vm288 = vcmp.lt.s32.totalorder %v287, 7
    %v289 = vsel %vm288, %v284, %v285
    %v290 = vsel %vm288, %v283, %v284
    %v291 = vsel %vm288, %v282, %v283
    %v292 = vsel %vm288, %v281, %v282
    %v293 = vsel %vm288, %v280, %v281
    %v294 = vsel %vm288, %v279, %v280
    %v295 = vsel %vm288, %v278, %v279
    %v296 = vsel %vm288, %v277, %v278
    %v297 = vsel %vm288, %v276, %v277
    %v298 = vsel %vm288, %v275, %v276
    %v299 = vsel %vm288, %v274, %v275
    %v300 = vsel %vm288, %v273, %v274
    %v301 = vsel %vm288, %v272, %v273
    %v302 = vsel %vm288, %v271, %v272
    %v303 = vsel %vm288, %v270, %v271
    %v304 = vsel %vm288, %v285, %v270
    %v307 = vunpack.c.l.b16 %v97
    %v308 = vunpack.c.l.b16 %v98
    %v309 = vpack.c.b16 %v308, %v307
    %311 = vmatprep.subr.bf16.mxu0 0
    %312 = vmatpush1.bf16.msra.mxu0 0
    %313 = vmatprep.subr.bf16.mxu0 0
    %314 = vmatpush1.bf16.msra.mxu0 0
    %315 = vmatprep.subr.bf16.mxu0 0
    %316 = vmatpush1.bf16.msra.mxu0 0
    %317 = vmatprep.subr.bf16.mxu0 0
    %318 = vmatpush1.bf16.msra.mxu0 0
    %319 = vmatprep.subr.bf16.mxu0 0
    %320 = vmatpush1.bf16.msra.mxu0 0
    %321 = vmatprep.subr.bf16.mxu0 0
    %322 = vmatpush1.bf16.msra.mxu0 0
    %323 = vmatprep.subr.bf16.mxu0 0
    %324 = vmatpush1.bf16.msra.mxu0 0
    %325 = vmatprep.subr.bf16.mxu0 0
    %326 = vmatpush1.bf16.msra.mxu0 %v309
    %327 = vmatprep.subr.bf16.mxu0 0
    %328 = vmatpush2.bf16.msra.mxu0 0
    %329 = vmatprep.subr.bf16.mxu0 0
    %330 = vmatpush2.bf16.msra.mxu0 0
    %331 = vmatprep.subr.bf16.mxu0 0
    %332 = vmatpush2.bf16.msra.mxu0 0
    %333 = vmatprep.subr.bf16.mxu0 0
    %334 = vmatpush2.bf16.msra.mxu0 0
    %335 = vmatprep.subr.bf16.mxu0 0
    %336 = vmatpush2.bf16.msra.mxu0 0
    %337 = vmatprep.subr.bf16.mxu0 0
    %338 = vmatpush2.bf16.msra.mxu0 0
    %339 = vmatprep.subr.bf16.mxu0 0
    %340 = vmatpush2.bf16.msra.mxu0 0
    %341 = vmatprep.subr.bf16.mxu0 0
    %342 = vmatpush2.bf16.msra.mxu0 0
    %343 = vmatprep.mubr.bf16.mxu0 0
    %344 = vmatmul.mubr.bf16.gmra.mxu0 %v150
    %v345 = vpop.f32.mrf.mxu0
    %v346 = vadd.f32 %v303, %v345
    %v347 = vpop.f32.mrf.mxu0
    %v348 = vpop.f32.mrf.mxu0
    %v349 = vadd.f32 %v302, %v348
    %v350 = vpop.f32.mrf.mxu0
    %351 = vmatprep.mubr.bf16.mxu0 0
    %352 = vmatmul.mubr.bf16.gmra.mxu0 %v153
    %v353 = vpop.f32.mrf.mxu0
    %v354 = vadd.f32 %v301, %v353
    %v355 = vpop.f32.mrf.mxu0
    %v356 = vpop.f32.mrf.mxu0
    %v357 = vadd.f32 %v300, %v356
    %v358 = vpop.f32.mrf.mxu0
    %359 = vmatprep.mubr.bf16.mxu0 0
    %360 = vmatmul.mubr.bf16.gmra.mxu0 %v156
    %v361 = vpop.f32.mrf.mxu0
    %v362 = vadd.f32 %v299, %v361
    %v363 = vpop.f32.mrf.mxu0
    %v364 = vpop.f32.mrf.mxu0
    %v365 = vadd.f32 %v298, %v364
    %v366 = vpop.f32.mrf.mxu0
    %367 = vmatprep.mubr.bf16.mxu0 0
    %368 = vmatmul.mubr.bf16.gmra.mxu0 %v159
    %v369 = vpop.f32.mrf.mxu0
    %v370 = vadd.f32 %v297, %v369
    %v371 = vpop.f32.mrf.mxu0
    %v372 = vpop.f32.mrf.mxu0
    %v373 = vadd.f32 %v296, %v372
    %v374 = vpop.f32.mrf.mxu0
    %375 = vmatprep.mubr.bf16.mxu0 0
    %376 = vmatmul.mubr.bf16.gmra.mxu0 %v162
    %v377 = vpop.f32.mrf.mxu0
    %v378 = vadd.f32 %v295, %v377
    %v379 = vpop.f32.mrf.mxu0
    %v380 = vpop.f32.mrf.mxu0
    %v381 = vadd.f32 %v294, %v380
    %v382 = vpop.f32.mrf.mxu0
    %383 = vmatprep.mubr.bf16.mxu0 0
    %384 = vmatmul.mubr.bf16.gmra.mxu0 %v165
    %v385 = vpop.f32.mrf.mxu0
    %v386 = vadd.f32 %v293, %v385
    %v387 = vpop.f32.mrf.mxu0
    %v388 = vpop.f32.mrf.mxu0
    %v389 = vadd.f32 %v292, %v388
    %v390 = vpop.f32.mrf.mxu0
    %391 = vmatprep.mubr.bf16.mxu0 0
    %392 = vmatmul.mubr.bf16.gmra.mxu0 %v168
    %v393 = vpop.f32.mrf.mxu0
    %v394 = vadd.f32 %v291, %v393
    %v395 = vpop.f32.mrf.mxu0
    %v396 = vpop.f32.mrf.mxu0
    %v397 = vadd.f32 %v290, %v396
    %v398 = vpop.f32.mrf.mxu0
    %399 = vmatprep.mubr.bf16.mxu0 0
    %400 = vmatmul.mubr.bf16.gmra.mxu0 %v171
    %v401 = vpop.f32.mrf.mxu0
    %v402 = vadd.f32 %v289, %v401
    %v403 = vpop.f32.mrf.mxu0
    %v404 = vpop.f32.mrf.mxu0
    %v405 = vadd.f32 %v304, %v404
    %v406 = vpop.f32.mrf.mxu0
    %407 = vdwg.mxu0
    %s408 = scalar_lea.vmem %s1, 16
    %v409 = vld [vmem:[%s408] sm:$0xf]
    %v410 = vld [vmem:[%s408 + $0x4] sm:$0xf]
    %v413 = vunpack.c.l.b16 %v409
    %v414 = vunpack.c.l.b16 %v410
    %v415 = vpack.c.b16 %v414, %v413
    %417 = vmatprep.subr.bf16.mxu0 0
    %418 = vmatpush1.bf16.msra.mxu0 0
    %419 = vmatprep.subr.bf16.mxu0 0
    %420 = vmatpush1.bf16.msra.mxu0 0
    %421 = vmatprep.subr.bf16.mxu0 0
    %422 = vmatpush1.bf16.msra.mxu0 0
    %423 = vmatprep.subr.bf16.mxu0 0
    %424 = vmatpush1.bf16.msra.mxu0 0
    %425 = vmatprep.subr.bf16.mxu0 0
    %426 = vmatpush1.bf16.msra.mxu0 0
    %427 = vmatprep.subr.bf16.mxu0 0
    %428 = vmatpush1.bf16.msra.mxu0 0
    %429 = vmatprep.subr.bf16.mxu0 0
    %430 = vmatpush1.bf16.msra.mxu0 0
    %431 = vmatprep.subr.bf16.mxu0 0
    %432 = vmatpush1.bf16.msra.mxu0 %v415
    %433 = vmatprep.subr.bf16.mxu0 0
    %434 = vmatpush2.bf16.msra.mxu0 0
    %435 = vmatprep.subr.bf16.mxu0 0
    %436 = vmatpush2.bf16.msra.mxu0 0
    %437 = vmatprep.subr.bf16.mxu0 0
    %438 = vmatpush2.bf16.msra.mxu0 0
    %439 = vmatprep.subr.bf16.mxu0 0
    %440 = vmatpush2.bf16.msra.mxu0 0
    %441 = vmatprep.subr.bf16.mxu0 0
    %442 = vmatpush2.bf16.msra.mxu0 0
    %443 = vmatprep.subr.bf16.mxu0 0
    %444 = vmatpush2.bf16.msra.mxu0 0
    %445 = vmatprep.subr.bf16.mxu0 0
    %446 = vmatpush2.bf16.msra.mxu0 0
    %447 = vmatprep.subr.bf16.mxu0 0
    %448 = vmatpush2.bf16.msra.mxu0 0
    %449 = vmatprep.mubr.bf16.mxu0 0
    %450 = vmatmul.mubr.bf16.gmra.mxu0 %v150
    %v451 = vpop.f32.mrf.mxu0
    %v452 = vadd.f32 0.0, %v451
    %v453 = vpop.f32.mrf.mxu0
    %v454 = vpop.f32.mrf.mxu0
    %v455 = vadd.f32 0.0, %v454
    %v456 = vpop.f32.mrf.mxu0
    %457 = vmatprep.mubr.bf16.mxu0 0
    %458 = vmatmul.mubr.bf16.gmra.mxu0 %v153
    %v459 = vpop.f32.mrf.mxu0
    %v460 = vadd.f32 0.0, %v459
    %v461 = vpop.f32.mrf.mxu0
    %v462 = vpop.f32.mrf.mxu0
    %v463 = vadd.f32 0.0, %v462
    %v464 = vpop.f32.mrf.mxu0
    %465 = vmatprep.mubr.bf16.mxu0 0
    %466 = vmatmul.mubr.bf16.gmra.mxu0 %v156
    %v467 = vpop.f32.mrf.mxu0
    %v468 = vadd.f32 0.0, %v467
    %v469 = vpop.f32.mrf.mxu0
    %v470 = vpop.f32.mrf.mxu0
    %v471 = vadd.f32 0.0, %v470
    %v472 = vpop.f32.mrf.mxu0
    %473 = vmatprep.mubr.bf16.mxu0 0
    %474 = vmatmul.mubr.bf16.gmra.mxu0 %v159
    %v475 = vpop.f32.mrf.mxu0
    %v476 = vadd.f32 0.0, %v475
    %v477 = vpop.f32.mrf.mxu0
    %v478 = vpop.f32.mrf.mxu0
    %v479 = vadd.f32 0.0, %v478
    %v480 = vpop.f32.mrf.mxu0
    %481 = vmatprep.mubr.bf16.mxu0 0
    %482 = vmatmul.mubr.bf16.gmra.mxu0 %v162
    %v483 = vpop.f32.mrf.mxu0
    %v484 = vadd.f32 0.0, %v483
    %v485 = vpop.f32.mrf.mxu0
    %v486 = vpop.f32.mrf.mxu0
    %v487 = vadd.f32 0.0, %v486
    %v488 = vpop.f32.mrf.mxu0
    %489 = vmatprep.mubr.bf16.mxu0 0
    %490 = vmatmul.mubr.bf16.gmra.mxu0 %v165
    %v491 = vpop.f32.mrf.mxu0
    %v492 = vadd.f32 0.0, %v491
    %v493 = vpop.f32.mrf.mxu0
    %v494 = vpop.f32.mrf.mxu0
    %v495 = vadd.f32 0.0, %v494
    %v496 = vpop.f32.mrf.mxu0
    %497 = vmatprep.mubr.bf16.mxu0 0
    %498 = vmatmul.mubr.bf16.gmra.mxu0 %v168
    %v499 = vpop.f32.mrf.mxu0
    %v500 = vadd.f32 0.0, %v499
    %v501 = vpop.f32.mrf.mxu0
    %v502 = vpop.f32.mrf.mxu0
    %v503 = vadd.f32 0.0, %v502
    %v504 = vpop.f32.mrf.mxu0
    %505 = vmatprep.mubr.bf16.mxu0 0
    %506 = vmatmul.mubr.bf16.gmra.mxu0 %v171
    %v507 = vpop.f32.mrf.mxu0
    %v508 = vadd.f32 0.0, %v507
    %v509 = vpop.f32.mrf.mxu0
    %v510 = vpop.f32.mrf.mxu0
    %v511 = vadd.f32 0.0, %v510
    %v512 = vpop.f32.mrf.mxu0
    %513 = vdwg.mxu0
    %v514 = vrot.slane %v452, 2
    %v515 = vrot.slane %v455, 2
    %v516 = vrot.slane %v460, 2
    %v517 = vrot.slane %v463, 2
    %v518 = vrot.slane %v468, 2
    %v519 = vrot.slane %v471, 2
    %v520 = vrot.slane %v476, 2
    %v521 = vrot.slane %v479, 2
    %v522 = vrot.slane %v484, 2
    %v523 = vrot.slane %v487, 2
    %v524 = vrot.slane %v492, 2
    %v525 = vrot.slane %v495, 2
    %v526 = vrot.slane %v500, 2
    %v527 = vrot.slane %v503, 2
    %v528 = vrot.slane %v508, 2
    %v529 = vrot.slane %v511, 2
    %vm530 = vcmp.lt.s32.totalorder %v287, 6
    %v531 = vsel %vm530, %v528, %v529
    %v532 = vsel %vm530, %v527, %v528
    %v533 = vsel %vm530, %v526, %v527
    %v534 = vsel %vm530, %v525, %v526
    %v535 = vsel %vm530, %v524, %v525
    %v536 = vsel %vm530, %v523, %v524
    %v537 = vsel %vm530, %v522, %v523
    %v538 = vsel %vm530, %v521, %v522
    %v539 = vsel %vm530, %v520, %v521
    %v540 = vsel %vm530, %v519, %v520
    %v541 = vsel %vm530, %v518, %v519
    %v542 = vsel %vm530, %v517, %v518
    %v543 = vsel %vm530, %v516, %v517
    %v544 = vsel %vm530, %v515, %v516
    %v545 = vsel %vm530, %v514, %v515
    %v546 = vsel %vm530, %v529, %v514
    %v547 = vadd.f32 %v346, %v545
    %v548 = vadd.f32 %v349, %v544
    %v549 = vadd.f32 %v354, %v543
    %v550 = vadd.f32 %v357, %v542
    %v551 = vadd.f32 %v362, %v541
    %v552 = vadd.f32 %v365, %v540
    %v553 = vadd.f32 %v370, %v539
    %v554 = vadd.f32 %v373, %v538
    %v555 = vadd.f32 %v378, %v537
    %v556 = vadd.f32 %v381, %v536
    %v557 = vadd.f32 %v386, %v535
    %v558 = vadd.f32 %v389, %v534
    %v559 = vadd.f32 %v394, %v533
    %v560 = vadd.f32 %v397, %v532
    %v561 = vadd.f32 %v402, %v531
    %v562 = vadd.f32 %v405, %v546
    %v563 = vld [vmem:[%s2] sm:$0x1]
    %v565 = vlaneseq
    %v566 = vshrl.u32 %v565, 7
    %v567 = vsub.s32 0, %v566
    %v568 = vrot.slane %v563, %v567
    %v570 = vadd.f32 %v547, %v568
    %v571 = vadd.f32 %v548, %v568
    %v572 = vadd.f32 %v549, %v568
    %v573 = vadd.f32 %v550, %v568
    %v574 = vadd.f32 %v551, %v568
    %v575 = vadd.f32 %v552, %v568
    %v576 = vadd.f32 %v553, %v568
    %v577 = vadd.f32 %v554, %v568
    %v578 = vadd.f32 %v555, %v568
    %v579 = vadd.f32 %v556, %v568
    %v580 = vadd.f32 %v557, %v568
    %v581 = vadd.f32 %v558, %v568
    %v582 = vadd.f32 %v559, %v568
    %v583 = vadd.f32 %v560, %v568
    %v584 = vadd.f32 %v561, %v568
    %v585 = vadd.f32 %v562, %v568
    %v586 = vmax.f32 %v570, 0.0
    %v587 = vmax.f32 %v571, 0.0
    %v588 = vmax.f32 %v572, 0.0
    %v589 = vmax.f32 %v573, 0.0
    %v590 = vmax.f32 %v574, 0.0
    %v591 = vmax.f32 %v575, 0.0
    %v592 = vmax.f32 %v576, 0.0
    %v593 = vmax.f32 %v577, 0.0
    %v594 = vmax.f32 %v578, 0.0
    %v595 = vmax.f32 %v579, 0.0
    %v596 = vmax.f32 %v580, 0.0
    %v597 = vmax.f32 %v581, 0.0
    %v598 = vmax.f32 %v582, 0.0
    %v599 = vmax.f32 %v583, 0.0
    %v600 = vmax.f32 %v584, 0.0
    %v601 = vmax.f32 %v585, 0.0
    %v602 = vpack.c.bf16 %v587, %v586
    %v603 = vpack.c.bf16 %v589, %v588
    %v604 = vpack.c.bf16 %v591, %v590
    %v605 = vpack.c.bf16 %v593, %v592
    %v606 = vpack.c.bf16 %v595, %v594
    %v607 = vpack.c.bf16 %v597, %v596
    %v608 = vpack.c.bf16 %v599, %v598
    %v609 = vpack.c.bf16 %v601, %v600
    %v610 = vrot.slane %v586, 1
    %v611 = vrot.slane %v587, 1
    %v612 = vrot.slane %v588, 1
    %v613 = vrot.slane %v589, 1
    %v614 = vrot.slane %v590, 1
    %v615 = vrot.slane %v591, 1
    %v616 = vrot.slane %v592, 1
    %v617 = vrot.slane %v593, 1
    %v618 = vrot.slane %v594, 1
    %v619 = vrot.slane %v595, 1
    %v620 = vrot.slane %v596, 1
    %v621 = vrot.slane %v597, 1
    %v622 = vrot.slane %v598, 1
    %v623 = vrot.slane %v599, 1
    %v624 = vrot.slane %v600, 1
    %v625 = vrot.slane %v601, 1
    %v626 = vsel %vm288, %v624, %v625
    %v627 = vsel %vm288, %v623, %v624
    %v628 = vsel %vm288, %v622, %v623
    %v629 = vsel %vm288, %v621, %v622
    %v630 = vsel %vm288, %v620, %v621
    %v631 = vsel %vm288, %v619, %v620
    %v632 = vsel %vm288, %v618, %v619
    %v633 = vsel %vm288, %v617, %v618
    %v634 = vsel %vm288, %v616, %v617
    %v635 = vsel %vm288, %v615, %v616
    %v636 = vsel %vm288, %v614, %v615
    %v637 = vsel %vm288, %v613, %v614
    %v638 = vsel %vm288, %v612, %v613
    %v639 = vsel %vm288, %v611, %v612
    %v640 = vsel %vm288, %v610, %v611
    %v641 = vsel %vm288, %v625, %v610
    %v642 = vpack.c.bf16 %v639, %v640
    %v643 = vpack.c.bf16 %v637, %v638
    %v644 = vpack.c.bf16 %v635, %v636
    %v645 = vpack.c.bf16 %v633, %v634
    %v646 = vpack.c.bf16 %v631, %v632
    %v647 = vpack.c.bf16 %v629, %v630
    %v648 = vpack.c.bf16 %v627, %v628
    %v649 = vpack.c.bf16 %v641, %v626
    %v650 = vrot.slane %v586, 2
    %v651 = vrot.slane %v587, 2
    %v652 = vrot.slane %v588, 2
    %v653 = vrot.slane %v589, 2
    %v654 = vrot.slane %v590, 2
    %v655 = vrot.slane %v591, 2
    %v656 = vrot.slane %v592, 2
    %v657 = vrot.slane %v593, 2
    %v658 = vrot.slane %v594, 2
    %v659 = vrot.slane %v595, 2
    %v660 = vrot.slane %v596, 2
    %v661 = vrot.slane %v597, 2
    %v662 = vrot.slane %v598, 2
    %v663 = vrot.slane %v599, 2
    %v664 = vrot.slane %v600, 2
    %v665 = vrot.slane %v601, 2
    %v666 = vsel %vm530, %v664, %v665
    %v667 = vsel %vm530, %v663, %v664
    %v668 = vsel %vm530, %v662, %v663
    %v669 = vsel %vm530, %v661, %v662
    %v670 = vsel %vm530, %v660, %v661
    %v671 = vsel %vm530, %v659, %v660
    %v672 = vsel %vm530, %v658, %v659
    %v673 = vsel %vm530, %v657, %v658
    %v674 = vsel %vm530, %v656, %v657
    %v675 = vsel %vm530, %v655, %v656
    %v676 = vsel %vm530, %v654, %v655
    %v677 = vsel %vm530, %v653, %v654
    %v678 = vsel %vm530, %v652, %v653
    %v679 = vsel %vm530, %v651, %v652
    %v680 = vsel %vm530, %v650, %v651
    %v681 = vsel %vm530, %v665, %v650
    %v682 = vpack.c.bf16 %v679, %v680
    %v683 = vpack.c.bf16 %v677, %v678
    %v684 = vpack.c.bf16 %v675, %v676
    %v685 = vpack.c.bf16 %v673, %v674
    %v686 = vpack.c.bf16 %v671, %v672
    %v687 = vpack.c.bf16 %v669, %v670
    %v688 = vpack.c.bf16 %v667, %v668
    %v689 = vpack.c.bf16 %v681, %v666
    %v690 = vld [vmem:[%s3] sm:$0xf]
    %v691 = vld [vmem:[%s3 + $0x4] sm:$0xf]
    %v692 = vld [vmem:[%s3 + $0x8] sm:$0xf]
    %v693 = vld [vmem:[%s3 + $0xc] sm:$0xf]
    %v694 = vld [vmem:[%s3 + $0x10] sm:$0xf]
    %v695 = vld [vmem:[%s3 + $0x14] sm:$0xf]
    %v696 = vld [vmem:[%s3 + $0x18] sm:$0xf]
    %v697 = vld [vmem:[%s3 + $0x1c] sm:$0xf]
    %v698 = vld [vmem:[%s3 + $0x20] sm:$0xf]
    %v699 = vld [vmem:[%s3 + $0x24] sm:$0xf]
    %v700 = vld [vmem:[%s3 + $0x28] sm:$0xf]
    %v701 = vld [vmem:[%s3 + $0x2c] sm:$0xf]
    %v702 = vld [vmem:[%s3 + $0x30] sm:$0xf]
    %v703 = vld [vmem:[%s3 + $0x34] sm:$0xf]
    %v704 = vld [vmem:[%s3 + $0x38] sm:$0xf]
    %v705 = vld [vmem:[%s3 + $0x3c] sm:$0xf]
    %v706 = vld [vmem:[%s3 + $0x40] sm:$0xf]
    %v707 = vld [vmem:[%s3 + $0x44] sm:$0xf]
    %v708 = vld [vmem:[%s3 + $0x48] sm:$0xf]
    %v709 = vld [vmem:[%s3 + $0x4c] sm:$0xf]
    %v710 = vld [vmem:[%s3 + $0x50] sm:$0xf]
    %v711 = vld [vmem:[%s3 + $0x54] sm:$0xf]
    %v712 = vld [vmem:[%s3 + $0x58] sm:$0xf]
    %v713 = vld [vmem:[%s3 + $0x5c] sm:$0xf]
    %v714 = vld [vmem:[%s3 + $0x60] sm:$0xf]
    %v715 = vld [vmem:[%s3 + $0x64] sm:$0xf]
    %v716 = vld [vmem:[%s3 + $0x68] sm:$0xf]
    %v717 = vld [vmem:[%s3 + $0x6c] sm:$0xf]
    %v718 = vld [vmem:[%s3 + $0x70] sm:$0xf]
    %v719 = vld [vmem:[%s3 + $0x74] sm:$0xf]
    %v720 = vld [vmem:[%s3 + $0x78] sm:$0xf]
    %v721 = vld [vmem:[%s3 + $0x7c] sm:$0xf]
    %v722 = vld [vmem:[%s3 + $0x80] sm:$0xf]
    %v723 = vld [vmem:[%s3 + $0x84] sm:$0xf]
    %v724 = vld [vmem:[%s3 + $0x88] sm:$0xf]
    %v725 = vld [vmem:[%s3 + $0x8c] sm:$0xf]
    %v726 = vld [vmem:[%s3 + $0x90] sm:$0xf]
    %v727 = vld [vmem:[%s3 + $0x94] sm:$0xf]
    %v728 = vld [vmem:[%s3 + $0x98] sm:$0xf]
    %v729 = vld [vmem:[%s3 + $0x9c] sm:$0xf]
    %v730 = vld [vmem:[%s3 + $0xa0] sm:$0xf]
    %v731 = vld [vmem:[%s3 + $0xa4] sm:$0xf]
    %v732 = vld [vmem:[%s3 + $0xa8] sm:$0xf]
    %v733 = vld [vmem:[%s3 + $0xac] sm:$0xf]
    %v734 = vld [vmem:[%s3 + $0xb0] sm:$0xf]
    %v735 = vld [vmem:[%s3 + $0xb4] sm:$0xf]
    %v736 = vld [vmem:[%s3 + $0xb8] sm:$0xf]
    %v737 = vld [vmem:[%s3 + $0xbc] sm:$0xf]
    %v738 = vld [vmem:[%s4] sm:$0x1]
    %v740 = vlaneseq
    %v741 = vshrl.u32 %v740, 7
    %v742 = vsub.s32 0, %v741
    %v743 = vrot.slane %v738, %v742
    %v793 = vunpack.c.l.b16 %v690
    %v794 = vunpack.c.l.b16 %v691
    %v795 = vunpack.c.l.b16 %v692
    %v796 = vunpack.c.l.b16 %v693
    %v797 = vunpack.c.l.b16 %v694
    %v798 = vunpack.c.l.b16 %v695
    %v799 = vunpack.c.l.b16 %v696
    %v800 = vunpack.c.l.b16 %v697
    %v801 = vunpack.c.l.b16 %v698
    %v802 = vunpack.c.l.b16 %v699
    %v803 = vunpack.c.l.b16 %v700
    %v804 = vunpack.c.l.b16 %v701
    %v805 = vunpack.c.l.b16 %v702
    %v806 = vunpack.c.l.b16 %v703
    %v807 = vunpack.c.l.b16 %v704
    %v808 = vunpack.c.l.b16 %v705
    %v809 = vunpack.c.l.b16 %v706
    %v810 = vunpack.c.l.b16 %v707
    %v811 = vunpack.c.l.b16 %v708
    %v812 = vunpack.c.l.b16 %v709
    %v813 = vunpack.c.l.b16 %v710
    %v814 = vunpack.c.l.b16 %v711
    %v815 = vunpack.c.l.b16 %v712
    %v816 = vunpack.c.l.b16 %v713
    %v817 = vunpack.c.l.b16 %v714
    %v818 = vunpack.c.l.b16 %v715
    %v819 = vunpack.c.l.b16 %v716
    %v820 = vunpack.c.l.b16 %v717
    %v821 = vunpack.c.l.b16 %v718
    %v822 = vunpack.c.l.b16 %v719
    %v823 = vunpack.c.l.b16 %v720
    %v824 = vunpack.c.l.b16 %v721
    %v825 = vunpack.c.l.b16 %v722
    %v826 = vunpack.c.l.b16 %v723
    %v827 = vunpack.c.l.b16 %v724
    %v828 = vunpack.c.l.b16 %v725
    %v829 = vunpack.c.l.b16 %v726
    %v830 = vunpack.c.l.b16 %v727
    %v831 = vunpack.c.l.b16 %v728
    %v832 = vunpack.c.l.b16 %v729
    %v833 = vunpack.c.l.b16 %v730
    %v834 = vunpack.c.l.b16 %v731
    %v835 = vunpack.c.l.b16 %v732
    %v836 = vunpack.c.l.b16 %v733
    %v837 = vunpack.c.l.b16 %v734
    %v838 = vunpack.c.l.b16 %v735
    %v839 = vunpack.c.l.b16 %v736
    %v840 = vunpack.c.l.b16 %v737
    %v841 = vpack.c.b16 %v794, %v793
    %v842 = vpack.c.b16 %v796, %v795
    %v843 = vpack.c.b16 %v798, %v797
    %v844 = vpack.c.b16 %v800, %v799
    %v845 = vpack.c.b16 %v802, %v801
    %v846 = vpack.c.b16 %v804, %v803
    %v847 = vpack.c.b16 %v806, %v805
    %v848 = vpack.c.b16 %v808, %v807
    %v849 = vpack.c.b16 %v810, %v809
    %v850 = vpack.c.b16 %v812, %v811
    %v851 = vpack.c.b16 %v814, %v813
    %v852 = vpack.c.b16 %v816, %v815
    %v853 = vpack.c.b16 %v818, %v817
    %v854 = vpack.c.b16 %v820, %v819
    %v855 = vpack.c.b16 %v822, %v821
    %v856 = vpack.c.b16 %v824, %v823
    %v857 = vpack.c.b16 %v826, %v825
    %v858 = vpack.c.b16 %v828, %v827
    %v859 = vpack.c.b16 %v830, %v829
    %v860 = vpack.c.b16 %v832, %v831
    %v861 = vpack.c.b16 %v834, %v833
    %v862 = vpack.c.b16 %v836, %v835
    %v863 = vpack.c.b16 %v838, %v837
    %v864 = vpack.c.b16 %v840, %v839
    %889 = vmatprep.subr.bf16.mxu0 0
    %890 = vmatpush1.bf16.msra.mxu0 %v848
    %891 = vmatprep.subr.bf16.mxu0 0
    %892 = vmatpush1.bf16.msra.mxu0 %v847
    %893 = vmatprep.subr.bf16.mxu0 0
    %894 = vmatpush1.bf16.msra.mxu0 %v846
    %895 = vmatprep.subr.bf16.mxu0 0
    %896 = vmatpush1.bf16.msra.mxu0 %v845
    %897 = vmatprep.subr.bf16.mxu0 0
    %898 = vmatpush1.bf16.msra.mxu0 %v844
    %899 = vmatprep.subr.bf16.mxu0 0
    %900 = vmatpush1.bf16.msra.mxu0 %v843
    %901 = vmatprep.subr.bf16.mxu0 0
    %902 = vmatpush1.bf16.msra.mxu0 %v842
    %903 = vmatprep.subr.bf16.mxu0 0
    %904 = vmatpush1.bf16.msra.mxu0 %v841
    %905 = vmatprep.subr.bf16.mxu0 0
    %906 = vmatpush2.bf16.msra.mxu0 %v856
    %907 = vmatprep.subr.bf16.mxu0 0
    %908 = vmatpush2.bf16.msra.mxu0 %v855
    %909 = vmatprep.subr.bf16.mxu0 0
    %910 = vmatpush2.bf16.msra.mxu0 %v854
    %911 = vmatprep.subr.bf16.mxu0 0
    %912 = vmatpush2.bf16.msra.mxu0 %v853
    %913 = vmatprep.subr.bf16.mxu0 0
    %914 = vmatpush2.bf16.msra.mxu0 %v852
    %915 = vmatprep.subr.bf16.mxu0 0
    %916 = vmatpush2.bf16.msra.mxu0 %v851
    %917 = vmatprep.subr.bf16.mxu0 0
    %918 = vmatpush2.bf16.msra.mxu0 %v850
    %919 = vmatprep.subr.bf16.mxu0 0
    %920 = vmatpush2.bf16.msra.mxu0 %v849
    %921 = vmatprep.mubr.bf16.mxu0 %v642
    %922 = vmatmul.mubr.bf16.gmra.mxu0 %v602
    %v923 = vpop.f32.mrf.mxu0
    %v924 = vadd.f32 %v743, %v923
    %v925 = vpop.f32.mrf.mxu0
    %v926 = vpop.f32.mrf.mxu0
    %v927 = vadd.f32 %v743, %v926
    %v928 = vpop.f32.mrf.mxu0
    %929 = vmatprep.mubr.bf16.mxu0 %v643
    %930 = vmatmul.mubr.bf16.gmra.mxu0 %v603
    %v931 = vpop.f32.mrf.mxu0
    %v932 = vadd.f32 %v743, %v931
    %v933 = vpop.f32.mrf.mxu0
    %v934 = vpop.f32.mrf.mxu0
    %v935 = vadd.f32 %v743, %v934
    %v936 = vpop.f32.mrf.mxu0
    %937 = vmatprep.mubr.bf16.mxu0 %v644
    %938 = vmatmul.mubr.bf16.gmra.mxu0 %v604
    %v939 = vpop.f32.mrf.mxu0
    %v940 = vadd.f32 %v743, %v939
    %v941 = vpop.f32.mrf.mxu0
    %v942 = vpop.f32.mrf.mxu0
    %v943 = vadd.f32 %v743, %v942
    %v944 = vpop.f32.mrf.mxu0
    %945 = vmatprep.mubr.bf16.mxu0 %v645
    %946 = vmatmul.mubr.bf16.gmra.mxu0 %v605
    %v947 = vpop.f32.mrf.mxu0
    %v948 = vadd.f32 %v743, %v947
    %v949 = vpop.f32.mrf.mxu0
    %v950 = vpop.f32.mrf.mxu0
    %v951 = vadd.f32 %v743, %v950
    %v952 = vpop.f32.mrf.mxu0
    %953 = vmatprep.mubr.bf16.mxu0 %v646
    %954 = vmatmul.mubr.bf16.gmra.mxu0 %v606
    %v955 = vpop.f32.mrf.mxu0
    %v956 = vadd.f32 %v743, %v955
    %v957 = vpop.f32.mrf.mxu0
    %v958 = vpop.f32.mrf.mxu0
    %v959 = vadd.f32 %v743, %v958
    %v960 = vpop.f32.mrf.mxu0
    %961 = vmatprep.mubr.bf16.mxu0 %v647
    %962 = vmatmul.mubr.bf16.gmra.mxu0 %v607
    %v963 = vpop.f32.mrf.mxu0
    %v964 = vadd.f32 %v743, %v963
    %v965 = vpop.f32.mrf.mxu0
    %v966 = vpop.f32.mrf.mxu0
    %v967 = vadd.f32 %v743, %v966
    %v968 = vpop.f32.mrf.mxu0
    %969 = vmatprep.mubr.bf16.mxu0 %v648
    %970 = vmatmul.mubr.bf16.gmra.mxu0 %v608
    %v971 = vpop.f32.mrf.mxu0
    %v972 = vadd.f32 %v743, %v971
    %v973 = vpop.f32.mrf.mxu0
    %v974 = vpop.f32.mrf.mxu0
    %v975 = vadd.f32 %v743, %v974
    %v976 = vpop.f32.mrf.mxu0
    %977 = vmatprep.mubr.bf16.mxu0 %v649
    %978 = vmatmul.mubr.bf16.gmra.mxu0 %v609
    %v979 = vpop.f32.mrf.mxu0
    %v980 = vadd.f32 %v743, %v979
    %v981 = vpop.f32.mrf.mxu0
    %v982 = vpop.f32.mrf.mxu0
    %v983 = vadd.f32 %v743, %v982
    %v984 = vpop.f32.mrf.mxu0
    %985 = vdwg.mxu0
    %986 = vmatprep.subr.bf16.mxu0 0
    %987 = vmatpush1.bf16.msra.mxu0 %v864
    %988 = vmatprep.subr.bf16.mxu0 0
    %989 = vmatpush1.bf16.msra.mxu0 %v863
    %990 = vmatprep.subr.bf16.mxu0 0
    %991 = vmatpush1.bf16.msra.mxu0 %v862
    %992 = vmatprep.subr.bf16.mxu0 0
    %993 = vmatpush1.bf16.msra.mxu0 %v861
    %994 = vmatprep.subr.bf16.mxu0 0
    %995 = vmatpush1.bf16.msra.mxu0 %v860
    %996 = vmatprep.subr.bf16.mxu0 0
    %997 = vmatpush1.bf16.msra.mxu0 %v859
    %998 = vmatprep.subr.bf16.mxu0 0
    %999 = vmatpush1.bf16.msra.mxu0 %v858
    %1000 = vmatprep.subr.bf16.mxu0 0
    %1001 = vmatpush1.bf16.msra.mxu0 %v857
    %1002 = vmatprep.subr.bf16.mxu0 0
    %1003 = vmatpush2.bf16.msra.mxu0 0
    %1004 = vmatprep.subr.bf16.mxu0 0
    %1005 = vmatpush2.bf16.msra.mxu0 0
    %1006 = vmatprep.subr.bf16.mxu0 0
    %1007 = vmatpush2.bf16.msra.mxu0 0
    %1008 = vmatprep.subr.bf16.mxu0 0
    %1009 = vmatpush2.bf16.msra.mxu0 0
    %1010 = vmatprep.subr.bf16.mxu0 0
    %1011 = vmatpush2.bf16.msra.mxu0 0
    %1012 = vmatprep.subr.bf16.mxu0 0
    %1013 = vmatpush2.bf16.msra.mxu0 0
    %1014 = vmatprep.subr.bf16.mxu0 0
    %1015 = vmatpush2.bf16.msra.mxu0 0
    %1016 = vmatprep.subr.bf16.mxu0 0
    %1017 = vmatpush2.bf16.msra.mxu0 0
    %1018 = vmatprep.mubr.bf16.mxu0 0
    %1019 = vmatmul.mubr.bf16.gmra.mxu0 %v682
    %v1020 = vpop.f32.mrf.mxu0
    %v1021 = vadd.f32 %v924, %v1020
    %v1022 = vpop.f32.mrf.mxu0
    %v1023 = vpop.f32.mrf.mxu0
    %v1024 = vadd.f32 %v927, %v1023
    %v1025 = vpop.f32.mrf.mxu0
    %1026 = vmatprep.mubr.bf16.mxu0 0
    %1027 = vmatmul.mubr.bf16.gmra.mxu0 %v683
    %v1028 = vpop.f32.mrf.mxu0
    %v1029 = vadd.f32 %v932, %v1028
    %v1030 = vpop.f32.mrf.mxu0
    %v1031 = vpop.f32.mrf.mxu0
    %v1032 = vadd.f32 %v935, %v1031
    %v1033 = vpop.f32.mrf.mxu0
    %1034 = vmatprep.mubr.bf16.mxu0 0
    %1035 = vmatmul.mubr.bf16.gmra.mxu0 %v684
    %v1036 = vpop.f32.mrf.mxu0
    %v1037 = vadd.f32 %v940, %v1036
    %v1038 = vpop.f32.mrf.mxu0
    %v1039 = vpop.f32.mrf.mxu0
    %v1040 = vadd.f32 %v943, %v1039
    %v1041 = vpop.f32.mrf.mxu0
    %1042 = vmatprep.mubr.bf16.mxu0 0
    %1043 = vmatmul.mubr.bf16.gmra.mxu0 %v685
    %v1044 = vpop.f32.mrf.mxu0
    %v1045 = vadd.f32 %v948, %v1044
    %v1046 = vpop.f32.mrf.mxu0
    %v1047 = vpop.f32.mrf.mxu0
    %v1048 = vadd.f32 %v951, %v1047
    %v1049 = vpop.f32.mrf.mxu0
    %1050 = vmatprep.mubr.bf16.mxu0 0
    %1051 = vmatmul.mubr.bf16.gmra.mxu0 %v686
    %v1052 = vpop.f32.mrf.mxu0
    %v1053 = vadd.f32 %v956, %v1052
    %v1054 = vpop.f32.mrf.mxu0
    %v1055 = vpop.f32.mrf.mxu0
    %v1056 = vadd.f32 %v959, %v1055
    %v1057 = vpop.f32.mrf.mxu0
    %1058 = vmatprep.mubr.bf16.mxu0 0
    %1059 = vmatmul.mubr.bf16.gmra.mxu0 %v687
    %v1060 = vpop.f32.mrf.mxu0
    %v1061 = vadd.f32 %v964, %v1060
    %v1062 = vpop.f32.mrf.mxu0
    %v1063 = vpop.f32.mrf.mxu0
    %v1064 = vadd.f32 %v967, %v1063
    %v1065 = vpop.f32.mrf.mxu0
    %1066 = vmatprep.mubr.bf16.mxu0 0
    %1067 = vmatmul.mubr.bf16.gmra.mxu0 %v688
    %v1068 = vpop.f32.mrf.mxu0
    %v1069 = vadd.f32 %v972, %v1068
    %v1070 = vpop.f32.mrf.mxu0
    %v1071 = vpop.f32.mrf.mxu0
    %v1072 = vadd.f32 %v975, %v1071
    %v1073 = vpop.f32.mrf.mxu0
    %1074 = vmatprep.mubr.bf16.mxu0 0
    %1075 = vmatmul.mubr.bf16.gmra.mxu0 %v689
    %v1076 = vpop.f32.mrf.mxu0
    %v1077 = vadd.f32 %v980, %v1076
    %v1078 = vpop.f32.mrf.mxu0
    %v1079 = vpop.f32.mrf.mxu0
    %v1080 = vadd.f32 %v983, %v1079
    %v1081 = vpop.f32.mrf.mxu0
    %1082 = vdwg.mxu0
    %v1083 = vmax.f32 %v1021, 0.0
    %v1084 = vmax.f32 %v1024, 0.0
    %v1085 = vmax.f32 %v1029, 0.0
    %v1086 = vmax.f32 %v1032, 0.0
    %v1087 = vmax.f32 %v1037, 0.0
    %v1088 = vmax.f32 %v1040, 0.0
    %v1089 = vmax.f32 %v1045, 0.0
    %v1090 = vmax.f32 %v1048, 0.0
    %v1091 = vmax.f32 %v1053, 0.0
    %v1092 = vmax.f32 %v1056, 0.0
    %v1093 = vmax.f32 %v1061, 0.0
    %v1094 = vmax.f32 %v1064, 0.0
    %v1095 = vmax.f32 %v1069, 0.0
    %v1096 = vmax.f32 %v1072, 0.0
    %v1097 = vmax.f32 %v1077, 0.0
    %v1098 = vmax.f32 %v1080, 0.0
    %v1099 = vpack.c.bf16 %v1084, %v1083
    %v1100 = vpack.c.bf16 %v1086, %v1085
    %v1101 = vpack.c.bf16 %v1088, %v1087
    %v1102 = vpack.c.bf16 %v1090, %v1089
    %v1103 = vpack.c.bf16 %v1092, %v1091
    %v1104 = vpack.c.bf16 %v1094, %v1093
    %v1105 = vpack.c.bf16 %v1096, %v1095
    %v1106 = vpack.c.bf16 %v1098, %v1097
    %v1107 = vrot.slane %v1083, 1
    %v1108 = vrot.slane %v1084, 1
    %v1109 = vrot.slane %v1085, 1
    %v1110 = vrot.slane %v1086, 1
    %v1111 = vrot.slane %v1087, 1
    %v1112 = vrot.slane %v1088, 1
    %v1113 = vrot.slane %v1089, 1
    %v1114 = vrot.slane %v1090, 1
    %v1115 = vrot.slane %v1091, 1
    %v1116 = vrot.slane %v1092, 1
    %v1117 = vrot.slane %v1093, 1
    %v1118 = vrot.slane %v1094, 1
    %v1119 = vrot.slane %v1095, 1
    %v1120 = vrot.slane %v1096, 1
    %v1121 = vrot.slane %v1097, 1
    %v1122 = vrot.slane %v1098, 1
    %v1123 = vsel %vm288, %v1121, %v1122
    %v1124 = vsel %vm288, %v1120, %v1121
    %v1125 = vsel %vm288, %v1119, %v1120
    %v1126 = vsel %vm288, %v1118, %v1119
    %v1127 = vsel %vm288, %v1117, %v1118
    %v1128 = vsel %vm288, %v1116, %v1117
    %v1129 = vsel %vm288, %v1115, %v1116
    %v1130 = vsel %vm288, %v1114, %v1115
    %v1131 = vsel %vm288, %v1113, %v1114
    %v1132 = vsel %vm288, %v1112, %v1113
    %v1133 = vsel %vm288, %v1111, %v1112
    %v1134 = vsel %vm288, %v1110, %v1111
    %v1135 = vsel %vm288, %v1109, %v1110
    %v1136 = vsel %vm288, %v1108, %v1109
    %v1137 = vsel %vm288, %v1107, %v1108
    %v1138 = vsel %vm288, %v1122, %v1107
    %v1139 = vpack.c.bf16 %v1136, %v1137
    %v1140 = vpack.c.bf16 %v1134, %v1135
    %v1141 = vpack.c.bf16 %v1132, %v1133
    %v1142 = vpack.c.bf16 %v1130, %v1131
    %v1143 = vpack.c.bf16 %v1128, %v1129
    %v1144 = vpack.c.bf16 %v1126, %v1127
    %v1145 = vpack.c.bf16 %v1124, %v1125
    %v1146 = vpack.c.bf16 %v1138, %v1123
    %v1147 = vrot.slane %v1083, 2
    %v1148 = vrot.slane %v1084, 2
    %v1149 = vrot.slane %v1085, 2
    %v1150 = vrot.slane %v1086, 2
    %v1151 = vrot.slane %v1087, 2
    %v1152 = vrot.slane %v1088, 2
    %v1153 = vrot.slane %v1089, 2
    %v1154 = vrot.slane %v1090, 2
    %v1155 = vrot.slane %v1091, 2
    %v1156 = vrot.slane %v1092, 2
    %v1157 = vrot.slane %v1093, 2
    %v1158 = vrot.slane %v1094, 2
    %v1159 = vrot.slane %v1095, 2
    %v1160 = vrot.slane %v1096, 2
    %v1161 = vrot.slane %v1097, 2
    %v1162 = vrot.slane %v1098, 2
    %v1163 = vsel %vm530, %v1161, %v1162
    %v1164 = vsel %vm530, %v1160, %v1161
    %v1165 = vsel %vm530, %v1159, %v1160
    %v1166 = vsel %vm530, %v1158, %v1159
    %v1167 = vsel %vm530, %v1157, %v1158
    %v1168 = vsel %vm530, %v1156, %v1157
    %v1169 = vsel %vm530, %v1155, %v1156
    %v1170 = vsel %vm530, %v1154, %v1155
    %v1171 = vsel %vm530, %v1153, %v1154
    %v1172 = vsel %vm530, %v1152, %v1153
    %v1173 = vsel %vm530, %v1151, %v1152
    %v1174 = vsel %vm530, %v1150, %v1151
    %v1175 = vsel %vm530, %v1149, %v1150
    %v1176 = vsel %vm530, %v1148, %v1149
    %v1177 = vsel %vm530, %v1147, %v1148
    %v1178 = vsel %vm530, %v1162, %v1147
    %v1179 = vpack.c.bf16 %v1176, %v1177
    %v1180 = vpack.c.bf16 %v1174, %v1175
    %v1181 = vpack.c.bf16 %v1172, %v1173
    %v1182 = vpack.c.bf16 %v1170, %v1171
    %v1183 = vpack.c.bf16 %v1168, %v1169
    %v1184 = vpack.c.bf16 %v1166, %v1167
    %v1185 = vpack.c.bf16 %v1164, %v1165
    %v1186 = vpack.c.bf16 %v1178, %v1163
    %v1187 = vld [vmem:[#allocation2] sm:$0xff]
    %v1188 = vld [vmem:[#allocation2 + $0x8] sm:$0xff]
    %v1189 = vld [vmem:[#allocation2 + $0x10] sm:$0xff]
    %v1190 = vld [vmem:[#allocation2 + $0x18] sm:$0xff]
    %v1191 = vld [vmem:[#allocation2 + $0x20] sm:$0xff]
    %v1192 = vld [vmem:[#allocation2 + $0x28] sm:$0xff]
    %v1193 = vld [vmem:[#allocation2 + $0x30] sm:$0xff]
    %v1194 = vld [vmem:[#allocation2 + $0x38] sm:$0xff]
    %v1195 = vld [vmem:[#allocation2 + $0x40] sm:$0xff]
    %v1196 = vld [vmem:[#allocation2 + $0x48] sm:$0xff]
    %v1197 = vld [vmem:[#allocation2 + $0x50] sm:$0xff]
    %v1198 = vld [vmem:[#allocation2 + $0x58] sm:$0xff]
    %v1199 = vld [vmem:[#allocation2 + $0x60] sm:$0xff]
    %v1200 = vld [vmem:[#allocation2 + $0x68] sm:$0xff]
    %v1201 = vld [vmem:[#allocation2 + $0x70] sm:$0xff]
    %v1202 = vld [vmem:[#allocation2 + $0x78] sm:$0xff]
    %v1203 = vld [vmem:[#allocation2 + $0x80] sm:$0xff]
    %v1204 = vld [vmem:[#allocation2 + $0x88] sm:$0xff]
    %v1205 = vld [vmem:[#allocation2 + $0x90] sm:$0xff]
    %v1206 = vld [vmem:[#allocation2 + $0x98] sm:$0xff]
    %v1207 = vld [vmem:[#allocation2 + $0xa0] sm:$0xff]
    %v1208 = vld [vmem:[#allocation2 + $0xa8] sm:$0xff]
    %v1209 = vld [vmem:[#allocation2 + $0xb0] sm:$0xff]
    %v1210 = vld [vmem:[#allocation2 + $0xb8] sm:$0xff]
    %v1211 = vld [vmem:[#allocation2 + $0xc0] sm:$0xff]
    %v1212 = vld [vmem:[#allocation2 + $0xc8] sm:$0xff]
    %v1213 = vld [vmem:[#allocation2 + $0xd0] sm:$0xff]
    %v1214 = vld [vmem:[#allocation2 + $0xd8] sm:$0xff]
    %v1215 = vld [vmem:[#allocation2 + $0xe0] sm:$0xff]
    %v1216 = vld [vmem:[#allocation2 + $0xe8] sm:$0xff]
    %v1217 = vld [vmem:[#allocation2 + $0xf0] sm:$0xff]
    %v1218 = vld [vmem:[#allocation2 + $0xf8] sm:$0xff]
    %v1219 = vld [vmem:[#allocation2 + $0x100] sm:$0xff]
    %v1220 = vld [vmem:[#allocation2 + $0x108] sm:$0xff]
    %v1221 = vld [vmem:[#allocation2 + $0x110] sm:$0xff]
    %v1222 = vld [vmem:[#allocation2 + $0x118] sm:$0xff]
    %v1223 = vld [vmem:[#allocation2 + $0x120] sm:$0xff]
    %v1224 = vld [vmem:[#allocation2 + $0x128] sm:$0xff]
    %v1225 = vld [vmem:[#allocation2 + $0x130] sm:$0xff]
    %v1226 = vld [vmem:[#allocation2 + $0x138] sm:$0xff]
    %v1227 = vld [vmem:[#allocation2 + $0x140] sm:$0xff]
    %v1228 = vld [vmem:[#allocation2 + $0x148] sm:$0xff]
    %v1229 = vld [vmem:[#allocation2 + $0x150] sm:$0xff]
    %v1230 = vld [vmem:[#allocation2 + $0x158] sm:$0xff]
    %v1231 = vld [vmem:[#allocation2 + $0x160] sm:$0xff]
    %v1232 = vld [vmem:[#allocation2 + $0x168] sm:$0xff]
    %v1233 = vld [vmem:[#allocation2 + $0x170] sm:$0xff]
    %v1234 = vld [vmem:[#allocation2 + $0x178] sm:$0xff]
    %v1235 = vld [vmem:[%s6] sm:$0x3]
    %v1237 = vlaneseq
    %v1238 = vshrl.u32 %v1237, 7
    %v1239 = vsub.s32 0, %v1238
    %v1240 = vrot.slane %v1235, %v1239
    %v1241 = vlaneseq
    %v1242 = vshrl.u32 %v1241, 7
    %v1243 = vsub.s32 1, %v1242
    %v1244 = vrot.slane %v1235, %v1243
    %v1295 = vunpack.c.l.b16 %v1187
    %v1296 = vunpack.c.h.b16 %v1187
    %v1297 = vunpack.c.l.b16 %v1188
    %v1298 = vunpack.c.h.b16 %v1188
    %v1299 = vunpack.c.l.b16 %v1189
    %v1300 = vunpack.c.h.b16 %v1189
    %v1301 = vunpack.c.l.b16 %v1190
    %v1302 = vunpack.c.h.b16 %v1190
    %v1303 = vunpack.c.l.b16 %v1191
    %v1304 = vunpack.c.h.b16 %v1191
    %v1305 = vunpack.c.l.b16 %v1192
    %v1306 = vunpack.c.h.b16 %v1192
    %v1307 = vunpack.c.l.b16 %v1193
    %v1308 = vunpack.c.h.b16 %v1193
    %v1309 = vunpack.c.l.b16 %v1194
    %v1310 = vunpack.c.h.b16 %v1194
    %v1311 = vunpack.c.l.b16 %v1195
    %v1312 = vunpack.c.h.b16 %v1195
    %v1313 = vunpack.c.l.b16 %v1196
    %v1314 = vunpack.c.h.b16 %v1196
    %v1315 = vunpack.c.l.b16 %v1197
    %v1316 = vunpack.c.h.b16 %v1197
    %v1317 = vunpack.c.l.b16 %v1198
    %v1318 = vunpack.c.h.b16 %v1198
    %v1319 = vunpack.c.l.b16 %v1199
    %v1320 = vunpack.c.h.b16 %v1199
    %v1321 = vunpack.c.l.b16 %v1200
    %v1322 = vunpack.c.h.b16 %v1200
    %v1323 = vunpack.c.l.b16 %v1201
    %v1324 = vunpack.c.h.b16 %v1201
    %v1325 = vunpack.c.l.b16 %v1202
    %v1326 = vunpack.c.h.b16 %v1202
    %v1327 = vunpack.c.l.b16 %v1203
    %v1328 = vunpack.c.h.b16 %v1203
    %v1329 = vunpack.c.l.b16 %v1204
    %v1330 = vunpack.c.h.b16 %v1204
    %v1331 = vunpack.c.l.b16 %v1205
    %v1332 = vunpack.c.h.b16 %v1205
    %v1333 = vunpack.c.l.b16 %v1206
    %v1334 = vunpack.c.h.b16 %v1206
    %v1335 = vunpack.c.l.b16 %v1207
    %v1336 = vunpack.c.h.b16 %v1207
    %v1337 = vunpack.c.l.b16 %v1208
    %v1338 = vunpack.c.h.b16 %v1208
    %v1339 = vunpack.c.l.b16 %v1209
    %v1340 = vunpack.c.h.b16 %v1209
    %v1341 = vunpack.c.l.b16 %v1210
    %v1342 = vunpack.c.h.b16 %v1210
    %v1343 = vunpack.c.l.b16 %v1211
    %v1344 = vunpack.c.h.b16 %v1211
    %v1345 = vunpack.c.l.b16 %v1212
    %v1346 = vunpack.c.h.b16 %v1212
    %v1347 = vunpack.c.l.b16 %v1213
    %v1348 = vunpack.c.h.b16 %v1213
    %v1349 = vunpack.c.l.b16 %v1214
    %v1350 = vunpack.c.h.b16 %v1214
    %v1351 = vunpack.c.l.b16 %v1215
    %v1352 = vunpack.c.h.b16 %v1215
    %v1353 = vunpack.c.l.b16 %v1216
    %v1354 = vunpack.c.h.b16 %v1216
    %v1355 = vunpack.c.l.b16 %v1217
    %v1356 = vunpack.c.h.b16 %v1217
    %v1357 = vunpack.c.l.b16 %v1218
    %v1358 = vunpack.c.h.b16 %v1218
    %v1359 = vunpack.c.l.b16 %v1219
    %v1360 = vunpack.c.h.b16 %v1219
    %v1361 = vunpack.c.l.b16 %v1220
    %v1362 = vunpack.c.h.b16 %v1220
    %v1363 = vunpack.c.l.b16 %v1221
    %v1364 = vunpack.c.h.b16 %v1221
    %v1365 = vunpack.c.l.b16 %v1222
    %v1366 = vunpack.c.h.b16 %v1222
    %v1367 = vunpack.c.l.b16 %v1223
    %v1368 = vunpack.c.h.b16 %v1223
    %v1369 = vunpack.c.l.b16 %v1224
    %v1370 = vunpack.c.h.b16 %v1224
    %v1371 = vunpack.c.l.b16 %v1225
    %v1372 = vunpack.c.h.b16 %v1225
    %v1373 = vunpack.c.l.b16 %v1226
    %v1374 = vunpack.c.h.b16 %v1226
    %v1375 = vunpack.c.l.b16 %v1227
    %v1376 = vunpack.c.h.b16 %v1227
    %v1377 = vunpack.c.l.b16 %v1228
    %v1378 = vunpack.c.h.b16 %v1228
    %v1379 = vunpack.c.l.b16 %v1229
    %v1380 = vunpack.c.h.b16 %v1229
    %v1381 = vunpack.c.l.b16 %v1230
    %v1382 = vunpack.c.h.b16 %v1230
    %v1383 = vunpack.c.l.b16 %v1231
    %v1384 = vunpack.c.h.b16 %v1231
    %v1385 = vunpack.c.l.b16 %v1232
    %v1386 = vunpack.c.h.b16 %v1232
    %v1387 = vunpack.c.l.b16 %v1233
    %v1388 = vunpack.c.h.b16 %v1233
    %v1389 = vunpack.c.l.b16 %v1234
    %v1390 = vunpack.c.h.b16 %v1234
    %v1391 = vpack.c.b16 %v1297, %v1295
    %v1392 = vpack.c.b16 %v1298, %v1296
    %v1393 = vpack.c.b16 %v1301, %v1299
    %v1394 = vpack.c.b16 %v1302, %v1300
    %v1395 = vpack.c.b16 %v1305, %v1303
    %v1396 = vpack.c.b16 %v1306, %v1304
    %v1397 = vpack.c.b16 %v1309, %v1307
    %v1398 = vpack.c.b16 %v1310, %v1308
    %v1399 = vpack.c.b16 %v1313, %v1311
    %v1400 = vpack.c.b16 %v1314, %v1312
    %v1401 = vpack.c.b16 %v1317, %v1315
    %v1402 = vpack.c.b16 %v1318, %v1316
    %v1403 = vpack.c.b16 %v1321, %v1319
    %v1404 = vpack.c.b16 %v1322, %v1320
    %v1405 = vpack.c.b16 %v1325, %v1323
    %v1406 = vpack.c.b16 %v1326, %v1324
    %v1407 = vpack.c.b16 %v1329, %v1327
    %v1408 = vpack.c.b16 %v1330, %v1328
    %v1409 = vpack.c.b16 %v1333, %v1331
    %v1410 = vpack.c.b16 %v1334, %v1332
    %v1411 = vpack.c.b16 %v1337, %v1335
    %v1412 = vpack.c.b16 %v1338, %v1336
    %v1413 = vpack.c.b16 %v1341, %v1339
    %v1414 = vpack.c.b16 %v1342, %v1340
    %v1415 = vpack.c.b16 %v1345, %v1343
    %v1416 = vpack.c.b16 %v1346, %v1344
    %v1417 = vpack.c.b16 %v1349, %v1347
    %v1418 = vpack.c.b16 %v1350, %v1348
    %v1419 = vpack.c.b16 %v1353, %v1351
    %v1420 = vpack.c.b16 %v1354, %v1352
    %v1421 = vpack.c.b16 %v1357, %v1355
    %v1422 = vpack.c.b16 %v1358, %v1356
    %v1423 = vpack.c.b16 %v1361, %v1359
    %v1424 = vpack.c.b16 %v1362, %v1360
    %v1425 = vpack.c.b16 %v1365, %v1363
    %v1426 = vpack.c.b16 %v1366, %v1364
    %v1427 = vpack.c.b16 %v1369, %v1367
    %v1428 = vpack.c.b16 %v1370, %v1368
    %v1429 = vpack.c.b16 %v1373, %v1371
    %v1430 = vpack.c.b16 %v1374, %v1372
    %v1431 = vpack.c.b16 %v1377, %v1375
    %v1432 = vpack.c.b16 %v1378, %v1376
    %v1433 = vpack.c.b16 %v1381, %v1379
    %v1434 = vpack.c.b16 %v1382, %v1380
    %v1435 = vpack.c.b16 %v1385, %v1383
    %v1436 = vpack.c.b16 %v1386, %v1384
    %v1437 = vpack.c.b16 %v1389, %v1387
    %v1438 = vpack.c.b16 %v1390, %v1388
    %1487 = vmatprep.subr.bf16.mxu0 %v1406
    %1488 = vmatpush1.bf16.msra.mxu0 %v1405
    %1489 = vmatprep.subr.bf16.mxu0 %v1404
    %1490 = vmatpush1.bf16.msra.mxu0 %v1403
    %1491 = vmatprep.subr.bf16.mxu0 %v1402
    %1492 = vmatpush1.bf16.msra.mxu0 %v1401
    %1493 = vmatprep.subr.bf16.mxu0 %v1400
    %1494 = vmatpush1.bf16.msra.mxu0 %v1399
    %1495 = vmatprep.subr.bf16.mxu0 %v1398
    %1496 = vmatpush1.bf16.msra.mxu0 %v1397
    %1497 = vmatprep.subr.bf16.mxu0 %v1396
    %1498 = vmatpush1.bf16.msra.mxu0 %v1395
    %1499 = vmatprep.subr.bf16.mxu0 %v1394
    %1500 = vmatpush1.bf16.msra.mxu0 %v1393
    %1501 = vmatprep.subr.bf16.mxu0 %v1392
    %1502 = vmatpush1.bf16.msra.mxu0 %v1391
    %1503 = vmatprep.subr.bf16.mxu0 %v1422
    %1504 = vmatpush2.bf16.msra.mxu0 %v1421
    %1505 = vmatprep.subr.bf16.mxu0 %v1420
    %1506 = vmatpush2.bf16.msra.mxu0 %v1419
    %1507 = vmatprep.subr.bf16.mxu0 %v1418
    %1508 = vmatpush2.bf16.msra.mxu0 %v1417
    %1509 = vmatprep.subr.bf16.mxu0 %v1416
    %1510 = vmatpush2.bf16.msra.mxu0 %v1415
    %1511 = vmatprep.subr.bf16.mxu0 %v1414
    %1512 = vmatpush2.bf16.msra.mxu0 %v1413
    %1513 = vmatprep.subr.bf16.mxu0 %v1412
    %1514 = vmatpush2.bf16.msra.mxu0 %v1411
    %1515 = vmatprep.subr.bf16.mxu0 %v1410
    %1516 = vmatpush2.bf16.msra.mxu0 %v1409
    %1517 = vmatprep.subr.bf16.mxu0 %v1408
    %1518 = vmatpush2.bf16.msra.mxu0 %v1407
    %1519 = vmatprep.mubr.bf16.mxu0 %v1139
    %1520 = vmatmul.mubr.bf16.gmra.mxu0 %v1099
    %v1521 = vpop.f32.mrf.mxu0
    %v1522 = vadd.f32 %v1240, %v1521
    %v1523 = vpop.f32.mrf.mxu0
    %v1524 = vadd.f32 %v1244, %v1523
    %v1525 = vpop.f32.mrf.mxu0
    %v1526 = vadd.f32 %v1240, %v1525
    %v1527 = vpop.f32.mrf.mxu0
    %v1528 = vadd.f32 %v1244, %v1527
    %1529 = vmatprep.mubr.bf16.mxu0 %v1140
    %1530 = vmatmul.mubr.bf16.gmra.mxu0 %v1100
    %v1531 = vpop.f32.mrf.mxu0
    %v1532 = vadd.f32 %v1240, %v1531
    %v1533 = vpop.f32.mrf.mxu0
    %v1534 = vadd.f32 %v1244, %v1533
    %v1535 = vpop.f32.mrf.mxu0
    %v1536 = vadd.f32 %v1240, %v1535
    %v1537 = vpop.f32.mrf.mxu0
    %v1538 = vadd.f32 %v1244, %v1537
    %1539 = vmatprep.mubr.bf16.mxu0 %v1141
    %1540 = vmatmul.mubr.bf16.gmra.mxu0 %v1101
    %v1541 = vpop.f32.mrf.mxu0
    %v1542 = vadd.f32 %v1240, %v1541
    %v1543 = vpop.f32.mrf.mxu0
    %v1544 = vadd.f32 %v1244, %v1543
    %v1545 = vpop.f32.mrf.mxu0
    %v1546 = vadd.f32 %v1240, %v1545
    %v1547 = vpop.f32.mrf.mxu0
    %v1548 = vadd.f32 %v1244, %v1547
    %1549 = vmatprep.mubr.bf16.mxu0 %v1142
    %1550 = vmatmul.mubr.bf16.gmra.mxu0 %v1102
    %v1551 = vpop.f32.mrf.mxu0
    %v1552 = vadd.f32 %v1240, %v1551
    %v1553 = vpop.f32.mrf.mxu0
    %v1554 = vadd.f32 %v1244, %v1553
    %v1555 = vpop.f32.mrf.mxu0
    %v1556 = vadd.f32 %v1240, %v1555
    %v1557 = vpop.f32.mrf.mxu0
    %v1558 = vadd.f32 %v1244, %v1557
    %1559 = vmatprep.mubr.bf16.mxu0 %v1143
    %1560 = vmatmul.mubr.bf16.gmra.mxu0 %v1103
    %v1561 = vpop.f32.mrf.mxu0
    %v1562 = vadd.f32 %v1240, %v1561
    %v1563 = vpop.f32.mrf.mxu0
    %v1564 = vadd.f32 %v1244, %v1563
    %v1565 = vpop.f32.mrf.mxu0
    %v1566 = vadd.f32 %v1240, %v1565
    %v1567 = vpop.f32.mrf.mxu0
    %v1568 = vadd.f32 %v1244, %v1567
    %1569 = vmatprep.mubr.bf16.mxu0 %v1144
    %1570 = vmatmul.mubr.bf16.gmra.mxu0 %v1104
    %v1571 = vpop.f32.mrf.mxu0
    %v1572 = vadd.f32 %v1240, %v1571
    %v1573 = vpop.f32.mrf.mxu0
    %v1574 = vadd.f32 %v1244, %v1573
    %v1575 = vpop.f32.mrf.mxu0
    %v1576 = vadd.f32 %v1240, %v1575
    %v1577 = vpop.f32.mrf.mxu0
    %v1578 = vadd.f32 %v1244, %v1577
    %1579 = vmatprep.mubr.bf16.mxu0 %v1145
    %1580 = vmatmul.mubr.bf16.gmra.mxu0 %v1105
    %v1581 = vpop.f32.mrf.mxu0
    %v1582 = vadd.f32 %v1240, %v1581
    %v1583 = vpop.f32.mrf.mxu0
    %v1584 = vadd.f32 %v1244, %v1583
    %v1585 = vpop.f32.mrf.mxu0
    %v1586 = vadd.f32 %v1240, %v1585
    %v1587 = vpop.f32.mrf.mxu0
    %v1588 = vadd.f32 %v1244, %v1587
    %1589 = vmatprep.mubr.bf16.mxu0 %v1146
    %1590 = vmatmul.mubr.bf16.gmra.mxu0 %v1106
    %v1591 = vpop.f32.mrf.mxu0
    %v1592 = vadd.f32 %v1240, %v1591
    %v1593 = vpop.f32.mrf.mxu0
    %v1594 = vadd.f32 %v1244, %v1593
    %v1595 = vpop.f32.mrf.mxu0
    %v1596 = vadd.f32 %v1240, %v1595
    %v1597 = vpop.f32.mrf.mxu0
    %v1598 = vadd.f32 %v1244, %v1597
    %1599 = vdwg.mxu0
    %1600 = vmatprep.subr.bf16.mxu0 %v1438
    %1601 = vmatpush1.bf16.msra.mxu0 %v1437
    %1602 = vmatprep.subr.bf16.mxu0 %v1436
    %1603 = vmatpush1.bf16.msra.mxu0 %v1435
    %1604 = vmatprep.subr.bf16.mxu0 %v1434
    %1605 = vmatpush1.bf16.msra.mxu0 %v1433
    %1606 = vmatprep.subr.bf16.mxu0 %v1432
    %1607 = vmatpush1.bf16.msra.mxu0 %v1431
    %1608 = vmatprep.subr.bf16.mxu0 %v1430
    %1609 = vmatpush1.bf16.msra.mxu0 %v1429
    %1610 = vmatprep.subr.bf16.mxu0 %v1428
    %1611 = vmatpush1.bf16.msra.mxu0 %v1427
    %1612 = vmatprep.subr.bf16.mxu0 %v1426
    %1613 = vmatpush1.bf16.msra.mxu0 %v1425
    %1614 = vmatprep.subr.bf16.mxu0 %v1424
    %1615 = vmatpush1.bf16.msra.mxu0 %v1423
    %1616 = vmatprep.subr.bf16.mxu0 0
    %1617 = vmatpush2.bf16.msra.mxu0 0
    %1618 = vmatprep.subr.bf16.mxu0 0
    %1619 = vmatpush2.bf16.msra.mxu0 0
    %1620 = vmatprep.subr.bf16.mxu0 0
    %1621 = vmatpush2.bf16.msra.mxu0 0
    %1622 = vmatprep.subr.bf16.mxu0 0
    %1623 = vmatpush2.bf16.msra.mxu0 0
    %1624 = vmatprep.subr.bf16.mxu0 0
    %1625 = vmatpush2.bf16.msra.mxu0 0
    %1626 = vmatprep.subr.bf16.mxu0 0
    %1627 = vmatpush2.bf16.msra.mxu0 0
    %1628 = vmatprep.subr.bf16.mxu0 0
    %1629 = vmatpush2.bf16.msra.mxu0 0
    %1630 = vmatprep.subr.bf16.mxu0 0
    %1631 = vmatpush2.bf16.msra.mxu0 0
    %1632 = vmatprep.mubr.bf16.mxu0 0
    %1633 = vmatmul.mubr.bf16.gmra.mxu0 %v1179
    %v1634 = vpop.f32.mrf.mxu0
    %v1635 = vadd.f32 %v1522, %v1634
    %v1636 = vpop.f32.mrf.mxu0
    %v1637 = vadd.f32 %v1524, %v1636
    %v1638 = vpop.f32.mrf.mxu0
    %v1639 = vadd.f32 %v1526, %v1638
    %v1640 = vpop.f32.mrf.mxu0
    %v1641 = vadd.f32 %v1528, %v1640
    %1642 = vmatprep.mubr.bf16.mxu0 0
    %1643 = vmatmul.mubr.bf16.gmra.mxu0 %v1180
    %v1644 = vpop.f32.mrf.mxu0
    %v1645 = vadd.f32 %v1532, %v1644
    %v1646 = vpop.f32.mrf.mxu0
    %v1647 = vadd.f32 %v1534, %v1646
    %v1648 = vpop.f32.mrf.mxu0
    %v1649 = vadd.f32 %v1536, %v1648
    %v1650 = vpop.f32.mrf.mxu0
    %v1651 = vadd.f32 %v1538, %v1650
    %1652 = vmatprep.mubr.bf16.mxu0 0
    %1653 = vmatmul.mubr.bf16.gmra.mxu0 %v1181
    %v1654 = vpop.f32.mrf.mxu0
    %v1655 = vadd.f32 %v1542, %v1654
    %v1656 = vpop.f32.mrf.mxu0
    %v1657 = vadd.f32 %v1544, %v1656
    %v1658 = vpop.f32.mrf.mxu0
    %v1659 = vadd.f32 %v1546, %v1658
    %v1660 = vpop.f32.mrf.mxu0
    %v1661 = vadd.f32 %v1548, %v1660
    %1662 = vmatprep.mubr.bf16.mxu0 0
    %1663 = vmatmul.mubr.bf16.gmra.mxu0 %v1182
    %v1664 = vpop.f32.mrf.mxu0
    %v1665 = vadd.f32 %v1552, %v1664
    %v1666 = vpop.f32.mrf.mxu0
    %v1667 = vadd.f32 %v1554, %v1666
    %v1668 = vpop.f32.mrf.mxu0
    %v1669 = vadd.f32 %v1556, %v1668
    %v1670 = vpop.f32.mrf.mxu0
    %v1671 = vadd.f32 %v1558, %v1670
    %1672 = vmatprep.mubr.bf16.mxu0 0
    %1673 = vmatmul.mubr.bf16.gmra.mxu0 %v1183
    %v1674 = vpop.f32.mrf.mxu0
    %v1675 = vadd.f32 %v1562, %v1674
    %v1676 = vpop.f32.mrf.mxu0
    %v1677 = vadd.f32 %v1564, %v1676
    %v1678 = vpop.f32.mrf.mxu0
    %v1679 = vadd.f32 %v1566, %v1678
    %v1680 = vpop.f32.mrf.mxu0
    %v1681 = vadd.f32 %v1568, %v1680
    %1682 = vmatprep.mubr.bf16.mxu0 0
    %1683 = vmatmul.mubr.bf16.gmra.mxu0 %v1184
    %v1684 = vpop.f32.mrf.mxu0
    %v1685 = vadd.f32 %v1572, %v1684
    %v1686 = vpop.f32.mrf.mxu0
    %v1687 = vadd.f32 %v1574, %v1686
    %v1688 = vpop.f32.mrf.mxu0
    %v1689 = vadd.f32 %v1576, %v1688
    %v1690 = vpop.f32.mrf.mxu0
    %v1691 = vadd.f32 %v1578, %v1690
    %1692 = vmatprep.mubr.bf16.mxu0 0
    %1693 = vmatmul.mubr.bf16.gmra.mxu0 %v1185
    %v1694 = vpop.f32.mrf.mxu0
    %v1695 = vadd.f32 %v1582, %v1694
    %v1696 = vpop.f32.mrf.mxu0
    %v1697 = vadd.f32 %v1584, %v1696
    %v1698 = vpop.f32.mrf.mxu0
    %v1699 = vadd.f32 %v1586, %v1698
    %v1700 = vpop.f32.mrf.mxu0
    %v1701 = vadd.f32 %v1588, %v1700
    %1702 = vmatprep.mubr.bf16.mxu0 0
    %1703 = vmatmul.mubr.bf16.gmra.mxu0 %v1186
    %v1704 = vpop.f32.mrf.mxu0
    %v1705 = vadd.f32 %v1592, %v1704
    %v1706 = vpop.f32.mrf.mxu0
    %v1707 = vadd.f32 %v1594, %v1706
    %v1708 = vpop.f32.mrf.mxu0
    %v1709 = vadd.f32 %v1596, %v1708
    %v1710 = vpop.f32.mrf.mxu0
    %v1711 = vadd.f32 %v1598, %v1710
    %1712 = vdwg.mxu0
    %v1713 = vmax.f32 %v1635, 0.0
    %v1714 = vmax.f32 %v1637, 0.0
    %v1715 = vmax.f32 %v1639, 0.0
    %v1716 = vmax.f32 %v1641, 0.0
    %v1717 = vmax.f32 %v1645, 0.0
    %v1718 = vmax.f32 %v1647, 0.0
    %v1719 = vmax.f32 %v1649, 0.0
    %v1720 = vmax.f32 %v1651, 0.0
    %v1721 = vmax.f32 %v1655, 0.0
    %v1722 = vmax.f32 %v1657, 0.0
    %v1723 = vmax.f32 %v1659, 0.0
    %v1724 = vmax.f32 %v1661, 0.0
    %v1725 = vmax.f32 %v1665, 0.0
    %v1726 = vmax.f32 %v1667, 0.0
    %v1727 = vmax.f32 %v1669, 0.0
    %v1728 = vmax.f32 %v1671, 0.0
    %v1729 = vmax.f32 %v1675, 0.0
    %v1730 = vmax.f32 %v1677, 0.0
    %v1731 = vmax.f32 %v1679, 0.0
    %v1732 = vmax.f32 %v1681, 0.0
    %v1733 = vmax.f32 %v1685, 0.0
    %v1734 = vmax.f32 %v1687, 0.0
    %v1735 = vmax.f32 %v1689, 0.0
    %v1736 = vmax.f32 %v1691, 0.0
    %v1737 = vmax.f32 %v1695, 0.0
    %v1738 = vmax.f32 %v1697, 0.0
    %v1739 = vmax.f32 %v1699, 0.0
    %v1740 = vmax.f32 %v1701, 0.0
    %v1741 = vmax.f32 %v1705, 0.0
    %v1742 = vmax.f32 %v1707, 0.0
    %v1743 = vmax.f32 %v1709, 0.0
    %v1744 = vmax.f32 %v1711, 0.0
    %v1745 = vadd.s32 %v287, 8
    %v1746 = vadd.s32 %v287, 16
    %v1747 = vadd.s32 %v287, 24
    %v1748 = vadd.s32 %v287, 32
    %v1749 = vadd.s32 %v287, 40
    %v1750 = vadd.s32 %v287, 48
    %v1751 = vadd.s32 %v287, 56
    %vm1752 = vcmp.lt.s32.totalorder %v287, 58
    %vm1753 = vcmp.lt.s32.totalorder %v1745, 58
    %vm1754 = vcmp.lt.s32.totalorder %v1746, 58
    %vm1755 = vcmp.lt.s32.totalorder %v1747, 58
    %vm1756 = vcmp.lt.s32.totalorder %v1748, 58
    %vm1757 = vcmp.lt.s32.totalorder %v1749, 58
    %vm1758 = vcmp.lt.s32.totalorder %v1750, 58
    %vm1759 = vcmp.lt.s32.totalorder %v1751, 58
    %v1760 = vsel %vm1752, %v1713, -1e+30
    %v1761 = vsel %vm1752, %v1714, -1e+30
    %v1762 = vsel %vm1753, %v1715, -1e+30
    %v1763 = vsel %vm1753, %v1716, -1e+30
    %v1764 = vsel %vm1754, %v1717, -1e+30
    %v1765 = vsel %vm1754, %v1718, -1e+30
    %v1766 = vsel %vm1755, %v1719, -1e+30
    %v1767 = vsel %vm1755, %v1720, -1e+30
    %v1768 = vsel %vm1756, %v1721, -1e+30
    %v1769 = vsel %vm1756, %v1722, -1e+30
    %v1770 = vsel %vm1757, %v1723, -1e+30
    %v1771 = vsel %vm1757, %v1724, -1e+30
    %v1772 = vsel %vm1758, %v1725, -1e+30
    %v1773 = vsel %vm1758, %v1726, -1e+30
    %v1774 = vsel %vm1759, %v1727, -1e+30
    %v1775 = vsel %vm1759, %v1728, -1e+30
    %v1776 = vsel %vm1752, %v1729, -1e+30
    %v1777 = vsel %vm1752, %v1730, -1e+30
    %v1778 = vsel %vm1753, %v1731, -1e+30
    %v1779 = vsel %vm1753, %v1732, -1e+30
    %v1780 = vsel %vm1754, %v1733, -1e+30
    %v1781 = vsel %vm1754, %v1734, -1e+30
    %v1782 = vsel %vm1755, %v1735, -1e+30
    %v1783 = vsel %vm1755, %v1736, -1e+30
    %v1784 = vsel %vm1756, %v1737, -1e+30
    %v1785 = vsel %vm1756, %v1738, -1e+30
    %v1786 = vsel %vm1757, %v1739, -1e+30
    %v1787 = vsel %vm1757, %v1740, -1e+30
    %v1788 = vsel %vm1758, %v1741, -1e+30
    %v1789 = vsel %vm1758, %v1742, -1e+30
    %v1790 = vsel %vm1759, %v1743, -1e+30
    %v1791 = vsel %vm1759, %v1744, -1e+30
    %v1792 = vmax.f32 %v1760, %v1762
    %v1793 = vmax.f32 %v1792, %v1764
    %v1794 = vmax.f32 %v1793, %v1766
    %v1795 = vmax.f32 %v1794, %v1768
    %v1796 = vmax.f32 %v1795, %v1770
    %v1797 = vmax.f32 %v1796, %v1772
    %v1798 = vmax.f32 %v1797, %v1774
    %v1799 = vrot.slane %v1798, 4
    %v1800 = vmax.f32 %v1798, %v1799
    %v1801 = vrot.slane %v1800, 2
    %v1802 = vmax.f32 %v1800, %v1801
    %v1803 = vrot.slane %v1802, 1
    %v1804 = vmax.f32 %v1802, %v1803
    %v1805 = vmax.f32 %v1761, %v1763
    %v1806 = vmax.f32 %v1805, %v1765
    %v1807 = vmax.f32 %v1806, %v1767
    %v1808 = vmax.f32 %v1807, %v1769
    %v1809 = vmax.f32 %v1808, %v1771
    %v1810 = vmax.f32 %v1809, %v1773
    %v1811 = vmax.f32 %v1810, %v1775
    %v1812 = vrot.slane %v1811, 4
    %v1813 = vmax.f32 %v1811, %v1812
    %v1814 = vrot.slane %v1813, 2
    %v1815 = vmax.f32 %v1813, %v1814
    %v1816 = vrot.slane %v1815, 1
    %v1817 = vmax.f32 %v1815, %v1816
    %v1818 = vmax.f32 %v1776, %v1778
    %v1819 = vmax.f32 %v1818, %v1780
    %v1820 = vmax.f32 %v1819, %v1782
    %v1821 = vmax.f32 %v1820, %v1784
    %v1822 = vmax.f32 %v1821, %v1786
    %v1823 = vmax.f32 %v1822, %v1788
    %v1824 = vmax.f32 %v1823, %v1790
    %v1825 = vrot.slane %v1824, 4
    %v1826 = vmax.f32 %v1824, %v1825
    %v1827 = vrot.slane %v1826, 2
    %v1828 = vmax.f32 %v1826, %v1827
    %v1829 = vrot.slane %v1828, 1
    %v1830 = vmax.f32 %v1828, %v1829
    %v1831 = vmax.f32 %v1777, %v1779
    %v1832 = vmax.f32 %v1831, %v1781
    %v1833 = vmax.f32 %v1832, %v1783
    %v1834 = vmax.f32 %v1833, %v1785
    %v1835 = vmax.f32 %v1834, %v1787
    %v1836 = vmax.f32 %v1835, %v1789
    %v1837 = vmax.f32 %v1836, %v1791
    %v1838 = vrot.slane %v1837, 4
    %v1839 = vmax.f32 %v1837, %v1838
    %v1840 = vrot.slane %v1839, 2
    %v1841 = vmax.f32 %v1839, %v1840
    %v1842 = vrot.slane %v1841, 1
    %v1843 = vmax.f32 %v1841, %v1842
    %v1844 = vpack.c.bf16 %v1804, %v1804
    %v1845 = vpack.c.bf16 %v1817, %v1817
    %v1846 = vpack.c.bf16 %v1830, %v1830
    %v1847 = vpack.c.bf16 %v1843, %v1843
    %v1848 = vld [vmem:[#allocation5] sm:$0xf]
    %v1849 = vld [vmem:[#allocation5 + $0x4] sm:$0xf]
    %v1850 = vld [vmem:[#allocation5 + $0x8] sm:$0xf]
    %v1851 = vld [vmem:[#allocation5 + $0xc] sm:$0xf]
    %v1852 = vld [vmem:[#allocation5 + $0x10] sm:$0xf]
    %v1853 = vld [vmem:[#allocation5 + $0x14] sm:$0xf]
    %v1854 = vld [vmem:[#allocation5 + $0x18] sm:$0xf]
    %v1855 = vld [vmem:[#allocation5 + $0x1c] sm:$0xf]
    %v1856 = vld [vmem:[#allocation5 + $0x20] sm:$0xf]
    %v1857 = vld [vmem:[#allocation5 + $0x24] sm:$0xf]
    %v1858 = vld [vmem:[#allocation5 + $0x28] sm:$0xf]
    %v1859 = vld [vmem:[#allocation5 + $0x2c] sm:$0xf]
    %v1860 = vld [vmem:[#allocation5 + $0x30] sm:$0xf]
    %v1861 = vld [vmem:[#allocation5 + $0x34] sm:$0xf]
    %v1862 = vld [vmem:[#allocation5 + $0x38] sm:$0xf]
    %v1863 = vld [vmem:[#allocation5 + $0x3c] sm:$0xf]
    %v1864 = vld [vmem:[#allocation5 + $0x40] sm:$0xf]
    %v1865 = vld [vmem:[#allocation5 + $0x44] sm:$0xf]
    %v1866 = vld [vmem:[#allocation5 + $0x48] sm:$0xf]
    %v1867 = vld [vmem:[#allocation5 + $0x4c] sm:$0xf]
    %v1868 = vld [vmem:[#allocation5 + $0x50] sm:$0xf]
    %v1869 = vld [vmem:[#allocation5 + $0x54] sm:$0xf]
    %v1870 = vld [vmem:[#allocation5 + $0x58] sm:$0xf]
    %v1871 = vld [vmem:[#allocation5 + $0x5c] sm:$0xf]
    %v1872 = vld [vmem:[#allocation5 + $0x60] sm:$0xf]
    %v1873 = vld [vmem:[#allocation5 + $0x64] sm:$0xf]
    %v1874 = vld [vmem:[#allocation5 + $0x68] sm:$0xf]
    %v1875 = vld [vmem:[#allocation5 + $0x6c] sm:$0xf]
    %v1876 = vld [vmem:[#allocation5 + $0x70] sm:$0xf]
    %v1877 = vld [vmem:[#allocation5 + $0x74] sm:$0xf]
    %v1878 = vld [vmem:[#allocation5 + $0x78] sm:$0xf]
    %v1879 = vld [vmem:[#allocation5 + $0x7c] sm:$0xf]
    %v1880 = vld [vmem:[%s8] sm:$0x1]
    %v1882 = vlaneseq
    %v1883 = vshrl.u32 %v1882, 7
    %v1884 = vsub.s32 0, %v1883
    %v1885 = vrot.slane %v1880, %v1884
    %v1891 = vunpack.c.l.b16 %v1844
    %v1892 = vunpack.c.l.b16 %v1845
    %v1893 = vunpack.c.l.b16 %v1846
    %v1894 = vunpack.c.l.b16 %v1847
    %vm1895 = vcmask 1041409
    %v1896 = vsel %vm1895, %v1893, %v1891
    %v1897 = vsel %vm1895, %v1894, %v1892
    %v1898 = vpack.c.b16 %v1896, %v1896
    %v1899 = vpack.c.b16 %v1897, %v1897
    %v1934 = vunpack.c.l.b16 %v1848
    %v1935 = vunpack.c.l.b16 %v1849
    %v1936 = vunpack.c.l.b16 %v1850
    %v1937 = vunpack.c.l.b16 %v1851
    %v1938 = vunpack.c.l.b16 %v1852
    %v1939 = vunpack.c.l.b16 %v1853
    %v1940 = vunpack.c.l.b16 %v1854
    %v1941 = vunpack.c.l.b16 %v1855
    %v1942 = vunpack.c.l.b16 %v1856
    %v1943 = vunpack.c.l.b16 %v1857
    %v1944 = vunpack.c.l.b16 %v1858
    %v1945 = vunpack.c.l.b16 %v1859
    %v1946 = vunpack.c.l.b16 %v1860
    %v1947 = vunpack.c.l.b16 %v1861
    %v1948 = vunpack.c.l.b16 %v1862
    %v1949 = vunpack.c.l.b16 %v1863
    %v1950 = vunpack.c.l.b16 %v1864
    %v1951 = vunpack.c.l.b16 %v1865
    %v1952 = vunpack.c.l.b16 %v1866
    %v1953 = vunpack.c.l.b16 %v1867
    %v1954 = vunpack.c.l.b16 %v1868
    %v1955 = vunpack.c.l.b16 %v1869
    %v1956 = vunpack.c.l.b16 %v1870
    %v1957 = vunpack.c.l.b16 %v1871
    %v1958 = vunpack.c.l.b16 %v1872
    %v1959 = vunpack.c.l.b16 %v1873
    %v1960 = vunpack.c.l.b16 %v1874
    %v1961 = vunpack.c.l.b16 %v1875
    %v1962 = vunpack.c.l.b16 %v1876
    %v1963 = vunpack.c.l.b16 %v1877
    %v1964 = vunpack.c.l.b16 %v1878
    %v1965 = vunpack.c.l.b16 %v1879
    %v1966 = vpack.c.b16 %v1935, %v1934
    %v1967 = vpack.c.b16 %v1937, %v1936
    %v1968 = vpack.c.b16 %v1939, %v1938
    %v1969 = vpack.c.b16 %v1941, %v1940
    %v1970 = vpack.c.b16 %v1943, %v1942
    %v1971 = vpack.c.b16 %v1945, %v1944
    %v1972 = vpack.c.b16 %v1947, %v1946
    %v1973 = vpack.c.b16 %v1949, %v1948
    %v1974 = vpack.c.b16 %v1951, %v1950
    %v1975 = vpack.c.b16 %v1953, %v1952
    %v1976 = vpack.c.b16 %v1955, %v1954
    %v1977 = vpack.c.b16 %v1957, %v1956
    %v1978 = vpack.c.b16 %v1959, %v1958
    %v1979 = vpack.c.b16 %v1961, %v1960
    %v1980 = vpack.c.b16 %v1963, %v1962
    %v1981 = vpack.c.b16 %v1965, %v1964
    %1998 = vmatprep.subr.bf16.mxu0 0
    %1999 = vmatpush1.bf16.msra.mxu0 %v1973
    %2000 = vmatprep.subr.bf16.mxu0 0
    %2001 = vmatpush1.bf16.msra.mxu0 %v1972
    %2002 = vmatprep.subr.bf16.mxu0 0
    %2003 = vmatpush1.bf16.msra.mxu0 %v1971
    %2004 = vmatprep.subr.bf16.mxu0 0
    %2005 = vmatpush1.bf16.msra.mxu0 %v1970
    %2006 = vmatprep.subr.bf16.mxu0 0
    %2007 = vmatpush1.bf16.msra.mxu0 %v1969
    %2008 = vmatprep.subr.bf16.mxu0 0
    %2009 = vmatpush1.bf16.msra.mxu0 %v1968
    %2010 = vmatprep.subr.bf16.mxu0 0
    %2011 = vmatpush1.bf16.msra.mxu0 %v1967
    %2012 = vmatprep.subr.bf16.mxu0 0
    %2013 = vmatpush1.bf16.msra.mxu0 %v1966
    %2014 = vmatprep.subr.bf16.mxu0 0
    %2015 = vmatpush2.bf16.msra.mxu0 %v1981
    %2016 = vmatprep.subr.bf16.mxu0 0
    %2017 = vmatpush2.bf16.msra.mxu0 %v1980
    %2018 = vmatprep.subr.bf16.mxu0 0
    %2019 = vmatpush2.bf16.msra.mxu0 %v1979
    %2020 = vmatprep.subr.bf16.mxu0 0
    %2021 = vmatpush2.bf16.msra.mxu0 %v1978
    %2022 = vmatprep.subr.bf16.mxu0 0
    %2023 = vmatpush2.bf16.msra.mxu0 %v1977
    %2024 = vmatprep.subr.bf16.mxu0 0
    %2025 = vmatpush2.bf16.msra.mxu0 %v1976
    %2026 = vmatprep.subr.bf16.mxu0 0
    %2027 = vmatpush2.bf16.msra.mxu0 %v1975
    %2028 = vmatprep.subr.bf16.mxu0 0
    %2029 = vmatpush2.bf16.msra.mxu0 %v1974
    %2030 = vmatprep.mubr.bf16.mxu0 %v1899
    %2031 = vmatmul.mubr.bf16.gmra.mxu0 %v1898
    %v2032 = vpop.f32.mrf.mxu0
    %v2033 = vadd.f32 %v1885, %v2032
    %v2034 = vpop.f32.mrf.mxu0
    %v2035 = vpop.f32.mrf.mxu0
    %v2036 = vpop.f32.mrf.mxu0
    %2037 = vdwg.mxu0
    %v2038 = vmax.f32 %v2033, 0.0
    %v2039 = vpack.c.bf16 %v2038, %v2038
    %v2040 = vld [vmem:[#allocation7] sm:$0xf]
    %v2041 = vld [vmem:[#allocation7 + $0x4] sm:$0xf]
    %v2042 = vld [vmem:[#allocation7 + $0x8] sm:$0xf]
    %v2043 = vld [vmem:[#allocation7 + $0xc] sm:$0xf]
    %v2044 = vld [vmem:[#allocation7 + $0x10] sm:$0xf]
    %v2045 = vld [vmem:[#allocation7 + $0x14] sm:$0xf]
    %v2046 = vld [vmem:[#allocation7 + $0x18] sm:$0xf]
    %v2047 = vld [vmem:[#allocation7 + $0x1c] sm:$0xf]
    %v2048 = vld [vmem:[#allocation7 + $0x20] sm:$0xf]
    %v2049 = vld [vmem:[#allocation7 + $0x24] sm:$0xf]
    %v2050 = vld [vmem:[#allocation7 + $0x28] sm:$0xf]
    %v2051 = vld [vmem:[#allocation7 + $0x2c] sm:$0xf]
    %v2052 = vld [vmem:[#allocation7 + $0x30] sm:$0xf]
    %v2053 = vld [vmem:[#allocation7 + $0x34] sm:$0xf]
    %v2054 = vld [vmem:[#allocation7 + $0x38] sm:$0xf]
    %v2055 = vld [vmem:[#allocation7 + $0x3c] sm:$0xf]
    %v2056 = vld [vmem:[%s10] sm:$0x1]
    %v2058 = vlaneseq
    %v2059 = vshrl.u32 %v2058, 7
    %v2060 = vsub.s32 0, %v2059
    %v2061 = vrot.slane %v2056, %v2060
    %v2079 = vunpack.c.l.b16 %v2040
    %v2080 = vunpack.c.l.b16 %v2041
    %v2081 = vunpack.c.l.b16 %v2042
    %v2082 = vunpack.c.l.b16 %v2043
    %v2083 = vunpack.c.l.b16 %v2044
    %v2084 = vunpack.c.l.b16 %v2045
    %v2085 = vunpack.c.l.b16 %v2046
    %v2086 = vunpack.c.l.b16 %v2047
    %v2087 = vunpack.c.l.b16 %v2048
    %v2088 = vunpack.c.l.b16 %v2049
    %v2089 = vunpack.c.l.b16 %v2050
    %v2090 = vunpack.c.l.b16 %v2051
    %v2091 = vunpack.c.l.b16 %v2052
    %v2092 = vunpack.c.l.b16 %v2053
    %v2093 = vunpack.c.l.b16 %v2054
    %v2094 = vunpack.c.l.b16 %v2055
    %v2095 = vpack.c.b16 %v2080, %v2079
    %v2096 = vpack.c.b16 %v2082, %v2081
    %v2097 = vpack.c.b16 %v2084, %v2083
    %v2098 = vpack.c.b16 %v2086, %v2085
    %v2099 = vpack.c.b16 %v2088, %v2087
    %v2100 = vpack.c.b16 %v2090, %v2089
    %v2101 = vpack.c.b16 %v2092, %v2091
    %v2102 = vpack.c.b16 %v2094, %v2093
    %2111 = vmatprep.subr.bf16.mxu0 0
    %2112 = vmatpush1.bf16.msra.mxu0 %v2102
    %2113 = vmatprep.subr.bf16.mxu0 0
    %2114 = vmatpush1.bf16.msra.mxu0 %v2101
    %2115 = vmatprep.subr.bf16.mxu0 0
    %2116 = vmatpush1.bf16.msra.mxu0 %v2100
    %2117 = vmatprep.subr.bf16.mxu0 0
    %2118 = vmatpush1.bf16.msra.mxu0 %v2099
    %2119 = vmatprep.subr.bf16.mxu0 0
    %2120 = vmatpush1.bf16.msra.mxu0 %v2098
    %2121 = vmatprep.subr.bf16.mxu0 0
    %2122 = vmatpush1.bf16.msra.mxu0 %v2097
    %2123 = vmatprep.subr.bf16.mxu0 0
    %2124 = vmatpush1.bf16.msra.mxu0 %v2096
    %2125 = vmatprep.subr.bf16.mxu0 0
    %2126 = vmatpush1.bf16.msra.mxu0 %v2095
    %2127 = vmatprep.subr.bf16.mxu0 0
    %2128 = vmatpush2.bf16.msra.mxu0 0
    %2129 = vmatprep.subr.bf16.mxu0 0
    %2130 = vmatpush2.bf16.msra.mxu0 0
    %2131 = vmatprep.subr.bf16.mxu0 0
    %2132 = vmatpush2.bf16.msra.mxu0 0
    %2133 = vmatprep.subr.bf16.mxu0 0
    %2134 = vmatpush2.bf16.msra.mxu0 0
    %2135 = vmatprep.subr.bf16.mxu0 0
    %2136 = vmatpush2.bf16.msra.mxu0 0
    %2137 = vmatprep.subr.bf16.mxu0 0
    %2138 = vmatpush2.bf16.msra.mxu0 0
    %2139 = vmatprep.subr.bf16.mxu0 0
    %2140 = vmatpush2.bf16.msra.mxu0 0
    %2141 = vmatprep.subr.bf16.mxu0 0
    %2142 = vmatpush2.bf16.msra.mxu0 0
    %2143 = vmatprep.mubr.bf16.mxu0 0
    %2144 = vmatmul.mubr.bf16.gmra.mxu0 %v2039
    %v2145 = vpop.f32.mrf.mxu0
    %v2146 = vadd.f32 %v2061, %v2145
    %v2147 = vpop.f32.mrf.mxu0
    %v2148 = vpop.f32.mrf.mxu0
    %v2149 = vpop.f32.mrf.mxu0
    %2150 = vdwg.mxu0
    %2151 = vst [vmem:[#allocation8] sm:$0x3] %v2146
    // Predicated region
    $region58: #{tse_cnn_forward.1} parent=1 // pred_check
      _
    $region59: #{tse_cnn_forward.1} parent=1 // pred_check_branch
      %2153 = sbr.rel (0) target = $region61
    $region60: #{tse_cnn_forward.1} parent=1 // pred_region
      %s2155 = ssub.s32 32, 32
      %2156 = vsyncadd [#allocation4], %s2155
      %s2158 = sshll.u32 [#allocation8], 4
      %s2159 = int_to_ptr.vmem [resolvable:$true] %s2158
      %2161 = dma.vmem_to_hbm [thread:$0]  %s2159, 32, %s11, [#allocation4]
    $region61: #{tse_cnn_forward.1} parent=1 // pred_fallthru
      _
    // Predicated region
    $region62: #{tse_cnn_forward.1} parent=1 // pred_check
      _
    $region63: #{tse_cnn_forward.1} parent=1 // pred_check_branch
      %2163 = sbr.rel (0) target = $region65
    $region64: #{tse_cnn_forward.1} parent=1 // pred_region
      %2164 = dma.done [#allocation4], 32
    $region65: #{tse_cnn_forward.1} parent=1 // pred_fallthru
      _
    %2165 = vsyncpa [#allocation3], 1
    %2166 = vsyncpa [#allocation6], 1
    %2167 = vsyncpa [#allocation4], 1

</llo_original>
